<compile_context>
chip_gen: v5e
topology: v5e:2x2
jax: 0.10.0
libtpu: 0.0.40
codegen_flags: <defaults>
</compile_context>

<pallas_src>
import jax
import jax.numpy as jnp
from jax.experimental import pallas as pl
from jax.experimental.pallas import tpu as pltpu

GEM_EPS = 1e-6   # GeM() default eps
L2_EPS = 1e-12   # F.normalize default eps used by L2Norm


def geoloc_head_kernel(x_ref, w1_ref, b1_ref, w2_ref, b2_ref, out_ref):
    # x_ref : (TB, 512)   bf16 pooled backbone features (AdaptiveAvgPool done in wrapper)
    # w1_ref: (512, 1024) bf16 fc weight, transposed + zero-padded   b1_ref: (1, 1024) f32
    # w2_ref: (1024, D)   bf16 aggregation Linear, transposed + zero-padded rows
    # b2_ref: (1, D) f32
    # out_ref: (TB, D) f32

    # self.fc = nn.Linear(512, 1000)   (hidden padded 1000 -> 1024 with zeros)
    y = jnp.dot(x_ref[...], w1_ref[...], preferred_element_type=jnp.float32)
    y = y + b1_ref[...]                                                   # (TB, 1024) f32

    # aggregation[0]: L2Norm (F.normalize, eps=1e-12).  Padded columns are exactly 0,
    # so the sum over 1024 equals the sum over the real 1000 columns.
    inv1 = jax.lax.rsqrt(jnp.maximum(jnp.sum(y * y, axis=1, keepdims=True),
                                     L2_EPS * L2_EPS))
    y = y * inv1

    # aggregation[1..2]: GeM + Flatten.  The fc output is a (B, 1000, 1, 1) map, so
    # GeM = (avg_{1x1}(clamp(x, eps)^p))^(1/p) = clamp(x, eps) exactly, for ANY p > 0
    # (including the learnable p).  No transcendentals needed.
    y = jnp.maximum(y, GEM_EPS)

    # aggregation[3]: nn.Linear(1000, fc_output_dim).  Padded y entries equal GEM_EPS,
    # but the corresponding 24 rows of w2 are exactly zero, so they contribute nothing.
    z = jnp.dot(y.astype(w2_ref.dtype), w2_ref[...],
                preferred_element_type=jnp.float32)
    z = z + b2_ref[...]                                                   # (TB, D) f32

    # aggregation[4]: final L2Norm
    inv2 = jax.lax.rsqrt(jnp.maximum(jnp.sum(z * z, axis=1, keepdims=True),
                                     L2_EPS * L2_EPS))
    out_ref[...] = (z * inv2).astype(out_ref.dtype)


def geolocalization_head(features_nchw, w_fc, b_fc, w_agg, b_agg, *, batch_tile=16):
    """features_nchw: (B, 512, H, W) backbone output. Returns (B, fc_output_dim)."""
    B, C, H, W = features_nchw.shape
    hid = w_fc.shape[0]                      # 1000
    out_dim = w_agg.shape[0]                 # fc_output_dim
    hid_pad = ((hid + 127) // 128) * 128     # 1024 (lane-dense hidden dim)

    # nn.AdaptiveAvgPool2d((1,1)) + view(B, -1), done in the wrapper: no NCHW transpose
    # copy, and only (B, 512) bytes reach the kernel.
    pooled = jnp.mean(features_nchw, axis=(2, 3)).astype(jnp.bfloat16)   # (B, 512)

    # Weight prep: transpose to (in, out), cast to bf16, zero-pad the hidden dim.
    w1 = jnp.zeros((C, hid_pad), jnp.bfloat16).at[:, :hid].set(
        jnp.transpose(w_fc).astype(jnp.bfloat16))
    b1 = jnp.zeros((1, hid_pad), jnp.float32).at[:, :hid].set(
        b_fc.reshape(1, -1).astype(jnp.float32))
    w2 = jnp.zeros((hid_pad, out_dim), jnp.bfloat16).at[:hid, :].set(
        jnp.transpose(w_agg).astype(jnp.bfloat16))   # padded rows MUST stay zero
    b2 = b_agg.reshape(1, -1).astype(jnp.float32)

    # Pad the batch to a multiple of the tile so every grid block is full (bf16-friendly
    # 16-row tiles); padded rows are computed and sliced off afterwards.
    bp = ((B + batch_tile - 1) // batch_tile) * batch_tile
    if bp != B:
        pooled = jnp.pad(pooled, ((0, bp - B), (0, 0)))

    out = pl.pallas_call(
        geoloc_head_kernel,
        out_shape=jax.ShapeDtypeStruct((bp, out_dim), jnp.float32),
        grid_spec=pltpu.PrefetchScalarGridSpec(
            num_scalar_prefetch=0,
            grid=(bp // batch_tile,),
            in_specs=[
                pl.BlockSpec((batch_tile, C), lambda i: (i, 0)),       # pooled features
                pl.BlockSpec((C, hid_pad), lambda i: (0, 0)),          # w1 (resident)
                pl.BlockSpec((1, hid_pad), lambda i: (0, 0)),          # b1
                pl.BlockSpec((hid_pad, out_dim), lambda i: (0, 0)),    # w2 (resident)
                pl.BlockSpec((1, out_dim), lambda i: (0, 0)),          # b2
            ],
            out_specs=pl.BlockSpec((batch_tile, out_dim), lambda i: (i, 0)),
        ),
        compiler_params=pltpu.CompilerParams(
            dimension_semantics=("parallel",),   # batch tiles shard across TCs on v7x
        ),
    )(pooled, w1, b1, w2, b2)
    return out[:B]


if __name__ == "__main__":
    key = jax.random.PRNGKey(0)
    k1, k2, k3, k4, k5 = jax.random.split(key, 5)

    # TODO(synk): pretrained ResNet18/VGG16 conv stack is not reimplemented; the kernel
    # consumes its output feature map (channels fixed at 512 because self.fc expects 512).
    B, C, H, W = 2, 512, 4, 4
    FC_OUTPUT_DIM = 128

    features = jax.random.normal(k1, (B, C, H, W), jnp.float32)

    # nn.Linear(512, 1000)
    w_fc = jax.random.normal(k2, (1000, C), jnp.float32) * (1.0 / jnp.sqrt(C))
    b_fc = jax.random.normal(k3, (1000,), jnp.float32) * 0.01
    # aggregation nn.Linear(1000, fc_output_dim)
    w_agg = jax.random.normal(k4, (FC_OUTPUT_DIM, 1000), jnp.float32) * (1.0 / jnp.sqrt(1000.0))
    b_agg = jax.random.normal(k5, (FC_OUTPUT_DIM,), jnp.float32) * 0.01

    out = geolocalization_head(features, w_fc, b_fc, w_agg, b_agg)
    out = jax.block_until_ready(out)

    # Plain-JAX reference of the same head, mirroring the kernel's bf16 storage of the
    # weights / activations (f32 accumulation).
    pooled = features.mean(axis=(2, 3))
    pooled_bf = pooled.astype(jnp.bfloat16).astype(jnp.float32)
    w1_bf = w_fc.astype(jnp.bfloat16).astype(jnp.float32)
    w2_bf = w_agg.astype(jnp.bfloat16).astype(jnp.float32)

    y = pooled_bf @ w1_bf.T + b_fc
    y = y / jnp.maximum(jnp.linalg.norm(y, axis=1, keepdims=True), L2_EPS)
    y = jnp.maximum(y, GEM_EPS)                 # GeM over a 1x1 window == clamp
    y_bf = y.astype(jnp.bfloat16).astype(jnp.float32)
    z = y_bf @ w2_bf.T + b_agg
    ref = z / jnp.maximum(jnp.linalg.norm(z, axis=1, keepdims=True), L2_EPS)

    assert out.shape == (B, FC_OUTPUT_DIM)
    assert jnp.allclose(out, ref, atol=1e-3, rtol=1e-3), "mismatch vs reference"
    print("KERNEL_OK")
</pallas_src>

<mosaic_0001>
module attributes {stable_mosaic.version = 11 : i64} {
  func.func @geoloc_head_kernel(%arg0: i32, %arg1: memref<16x512xbf16, #tpu.memory_space<vmem>>, %arg2: memref<512x1024xbf16, #tpu.memory_space<vmem>>, %arg3: memref<1x1024xf32, #tpu.memory_space<vmem>>, %arg4: memref<1024x128xbf16, #tpu.memory_space<vmem>>, %arg5: memref<1x128xf32, #tpu.memory_space<vmem>>, %arg6: memref<16x128xf32, #tpu.memory_space<vmem>>) attributes {dimension_semantics = [#tpu.dimension_semantics<parallel>], iteration_bounds = array<i64: 1>, scalar_prefetch = 0 : i64, scratch_operands = 0 : i64, tpu.core_type = #tpu.core_type<tc>, window_params = [{transform_indices = @transform_0, window_bounds = array<i64: 16, 512>}, {pipeline_mode = #tpu.pipeline_mode<synchronous>, transform_indices = @transform_1, window_bounds = array<i64: 512, 1024>}, {pipeline_mode = #tpu.pipeline_mode<synchronous>, transform_indices = @transform_2, window_bounds = array<i64: 1, 1024>}, {pipeline_mode = #tpu.pipeline_mode<synchronous>, transform_indices = @transform_3, window_bounds = array<i64: 1024, 128>}, {pipeline_mode = #tpu.pipeline_mode<synchronous>, transform_indices = @transform_4, window_bounds = array<i64: 1, 128>}, {transform_indices = @transform_5, window_bounds = array<i64: 16, 128>}]} {
    %c0 = arith.constant 0 : index
    %c0_0 = arith.constant 0 : index
    %0 = vector.load %arg1[%c0, %c0_0] : memref<16x512xbf16, #tpu.memory_space<vmem>>, vector<16x512xbf16>
    %c0_1 = arith.constant 0 : index
    %c0_2 = arith.constant 0 : index
    %1 = vector.load %arg2[%c0_1, %c0_2] : memref<512x1024xbf16, #tpu.memory_space<vmem>>, vector<512x1024xbf16>
    %cst = arith.constant dense<0.000000e+00> : vector<16x1024xf32>
    %2 = tpu.matmul %0, %1, %cst {dimension_numbers = #tpu.dot_dimension_numbers<[1], [0], [0], [1], [0, 0, 1, 1], [], []>} : vector<16x512xbf16>, vector<512x1024xbf16>, vector<16x1024xf32> -> vector<16x1024xf32>
    %c0_3 = arith.constant 0 : index
    %c0_4 = arith.constant 0 : index
    %3 = vector.load %arg3[%c0_3, %c0_4] : memref<1x1024xf32, #tpu.memory_space<vmem>>, vector<1x1024xf32>
    %4 = vector.broadcast %3 : vector<1x1024xf32> to vector<16x1024xf32>
    %5 = arith.addf %2, %4 : vector<16x1024xf32>
    %6 = arith.mulf %5, %5 : vector<16x1024xf32>
    %cst_5 = arith.constant dense<0.000000e+00> : vector<16xf32>
    %7 = vector.multi_reduction <add>, %6, %cst_5 [1] : vector<16x1024xf32> to vector<16xf32>
    %8 = vector.shape_cast %7 : vector<16xf32> to vector<16x1xf32>
    %cst_6 = arith.constant 1.000000e-24 : f32
    %9 = vector.broadcast %cst_6 : f32 to vector<16x1xf32>
    %10 = arith.maximumf %8, %9 : vector<16x1xf32>
    %11 = math.rsqrt %10 : vector<16x1xf32>
    %12 = vector.broadcast %11 : vector<16x1xf32> to vector<16x1024xf32>
    %13 = arith.mulf %5, %12 : vector<16x1024xf32>
    %cst_7 = arith.constant 9.99999997E-7 : f32
    %14 = vector.broadcast %cst_7 : f32 to vector<16x1024xf32>
    %15 = arith.maximumf %13, %14 : vector<16x1024xf32>
    %16 = arith.truncf %15 : vector<16x1024xf32> to vector<16x1024xbf16>
    %c0_8 = arith.constant 0 : index
    %c0_9 = arith.constant 0 : index
    %17 = vector.load %arg4[%c0_8, %c0_9] : memref<1024x128xbf16, #tpu.memory_space<vmem>>, vector<1024x128xbf16>
    %cst_10 = arith.constant dense<0.000000e+00> : vector<16x128xf32>
    %18 = tpu.matmul %16, %17, %cst_10 {dimension_numbers = #tpu.dot_dimension_numbers<[1], [0], [0], [1], [0, 0, 1, 1], [], []>} : vector<16x1024xbf16>, vector<1024x128xbf16>, vector<16x128xf32> -> vector<16x128xf32>
    %c0_11 = arith.constant 0 : index
    %c0_12 = arith.constant 0 : index
    %19 = vector.load %arg5[%c0_11, %c0_12] : memref<1x128xf32, #tpu.memory_space<vmem>>, vector<1x128xf32>
    %20 = vector.broadcast %19 : vector<1x128xf32> to vector<16x128xf32>
    %21 = arith.addf %18, %20 : vector<16x128xf32>
    %22 = arith.mulf %21, %21 : vector<16x128xf32>
    %cst_13 = arith.constant dense<0.000000e+00> : vector<16xf32>
    %23 = vector.multi_reduction <add>, %22, %cst_13 [1] : vector<16x128xf32> to vector<16xf32>
    %24 = vector.shape_cast %23 : vector<16xf32> to vector<16x1xf32>
    %cst_14 = arith.constant 1.000000e-24 : f32
    %25 = vector.broadcast %cst_14 : f32 to vector<16x1xf32>
    %26 = arith.maximumf %24, %25 : vector<16x1xf32>
    %27 = math.rsqrt %26 : vector<16x1xf32>
    %28 = vector.broadcast %27 : vector<16x1xf32> to vector<16x128xf32>
    %29 = arith.mulf %21, %28 : vector<16x128xf32>
    %c0_15 = arith.constant 0 : index
    %c0_16 = arith.constant 0 : index
    %30 = vector.load %arg6[%c0_15, %c0_16] : memref<16x128xf32, #tpu.memory_space<vmem>>, vector<16x128xf32>
    tpu.vector_store %arg6[%c0_15, %c0_16], %29 {strides = array<i32>} : memref<16x128xf32, #tpu.memory_space<vmem>>, vector<16x128xf32>,
    return
  }
  func.func @transform_0(%arg0: i32) -> (i32, i32) {
    %c0_i32 = arith.constant 0 : i32
    %c0_i32_0 = arith.constant 0 : i32
    return %arg0, %c0_i32 : i32, i32
  }
  func.func @transform_1(%arg0: i32) -> (i32, i32) {
    %c0_i32 = arith.constant 0 : i32
    %c0_i32_0 = arith.constant 0 : i32
    %c0_i32_1 = arith.constant 0 : i32
    return %c0_i32, %c0_i32_0 : i32, i32
  }
  func.func @transform_2(%arg0: i32) -> (i32, i32) {
    %c0_i32 = arith.constant 0 : i32
    %c0_i32_0 = arith.constant 0 : i32
    %c0_i32_1 = arith.constant 0 : i32
    return %c0_i32, %c0_i32_0 : i32, i32
  }
  func.func @transform_3(%arg0: i32) -> (i32, i32) {
    %c0_i32 = arith.constant 0 : i32
    %c0_i32_0 = arith.constant 0 : i32
    %c0_i32_1 = arith.constant 0 : i32
    return %c0_i32, %c0_i32_0 : i32, i32
  }
  func.func @transform_4(%arg0: i32) -> (i32, i32) {
    %c0_i32 = arith.constant 0 : i32
    %c0_i32_0 = arith.constant 0 : i32
    %c0_i32_1 = arith.constant 0 : i32
    return %c0_i32, %c0_i32_0 : i32, i32
  }
  func.func @transform_5(%arg0: i32) -> (i32, i32) {
    %c0_i32 = arith.constant 0 : i32
    %c0_i32_0 = arith.constant 0 : i32
    return %arg0, %c0_i32 : i32, i32
  }
}

</mosaic_0001>

<llo_original>
// kernel: tpu_custom_call.1
$region0: #{tpu_custom_call.1}
  #allocation0 [shape = 'u32[]', space=smem, size = 0x4, offset = 0x4, fixed_abs, tag = 'smem constant byte address 0x4 - core index']
  #allocation1 [shape = 'u32[72,128]{1,0:T(1,128)}', space=vmem, size = 0x9000, scoped, tag = 'internal scratch']
  %s0 = inlined_call_operand.hbm [shape: bf16[16,512], index: 0, kind: input, shape index: {}]
  %s1 = inlined_call_operand.hbm [shape: bf16[512,1024], index: 1, kind: input, shape index: {}]
  %s2 = inlined_call_operand.hbm [shape: f32[1,1024], index: 2, kind: input, shape index: {}]
  %s3 = inlined_call_operand.hbm [shape: bf16[1024,128], index: 3, kind: input, shape index: {}]
  %s4 = inlined_call_operand.vmem [shape: f32[1,128], index: 4, kind: input, shape index: {}]
  %s5 = inlined_call_operand.hbm [shape: f32[16,128], index: 5, kind: output, shape index: {}]
  %s6 = sld [smem:[#allocation0]]
  $region46: #{tpu_custom_call.1} parent=0
    _
  %s8 = ssub.s32 1, %s6
  %s9 = scalar_select 0, %s8, %s6
  $region1: #{tpu_custom_call.1} parent=0
    #allocation2 [shape = 'u8[16384]{0}', space=vmem, size = 0x4000, scoped, tag = 'input window, operand 0, single buffered']
    #allocation3 [shape = 's32[1]{0}', space=sflag, size = 0x4, scoped, tag = 'scoped memory for tpu_custom_call.1']
    #allocation4 [shape = 's32[1]{0}', space=sflag, size = 0x4, scoped, tag = 'scoped memory for tpu_custom_call.1']
    #allocation5 [shape = 'u8[1048576]{0}', space=vmem, size = 0x100000, scoped, tag = 'input window, operand 1, single buffered']
    #allocation6 [shape = 's32[1]{0}', space=sflag, size = 0x4, scoped, tag = 'scoped memory for tpu_custom_call.1']
    #allocation7 [shape = 'u8[4096]{0}', space=vmem, size = 0x1000, scoped, tag = 'input window, operand 2, single buffered']
    #allocation8 [shape = 'u8[262144]{0}', space=vmem, size = 0x40000, scoped, tag = 'input window, operand 3, single buffered']
    #allocation9 [shape = 's32[1]{0}', space=sflag, size = 0x4, scoped, tag = 'scoped memory for tpu_custom_call.1']
    #allocation10 [shape = 'u8[8192]{0}', space=vmem, size = 0x2000, scoped, tag = 'output window, operand 0, single buffered']
    %10 = vsyncpa [#allocation3], 0
    %11 = vsyncpa [#allocation6], 0
    %12 = vsyncpa [#allocation9], 0
    %13 = vsyncpa [#allocation4], 0
    // Predicated region
    $region2: #{tpu_custom_call.1} parent=1 // pred_check
      _
    $region3: #{tpu_custom_call.1} parent=1 // pred_check_branch
      %15 = sbr.rel (0) target = $region5
    $region4: #{tpu_custom_call.1} parent=1 // pred_region
      %17 = vsyncadd [#allocation3], 0
      %s18 = sshll.u32 %s0, 4
      %s19 = int_to_ptr.hbm [resolvable:$true] %s18
      %s20 = sshll.u32 [#allocation2], 4
      %s21 = int_to_ptr.vmem [resolvable:$true] %s20
      %26 = dma.hbm_to_vmem [thread:$0]  %s19, 512, %s21, [#allocation3], 256, 256, 16
    $region5: #{tpu_custom_call.1} parent=1 // pred_fallthru
      _
    // Predicated region
    $region6: #{tpu_custom_call.1} parent=1 // pred_check
      _
    $region7: #{tpu_custom_call.1} parent=1 // pred_check_branch
      %28 = sbr.rel (0) target = $region9
    $region8: #{tpu_custom_call.1} parent=1 // pred_region
      %30 = vsyncadd [#allocation6], 0
      %s31 = sshll.u32 %s1, 4
      %s32 = int_to_ptr.hbm [resolvable:$true] %s31
      %s33 = sshll.u32 [#allocation5], 4
      %s34 = int_to_ptr.vmem [resolvable:$true] %s33
      %39 = dma.hbm_to_vmem [thread:$0]  %s32, 32768, %s34, [#allocation6], 512, 512, 32
    $region9: #{tpu_custom_call.1} parent=1 // pred_fallthru
      _
    // Predicated region
    $region10: #{tpu_custom_call.1} parent=1 // pred_check
      _
    $region11: #{tpu_custom_call.1} parent=1 // pred_check_branch
      %41 = sbr.rel (0) target = $region13
    $region12: #{tpu_custom_call.1} parent=1 // pred_region
      %43 = vsyncadd [#allocation6], 0
      %s45 = sshll.u32 %s2, 4
      %s46 = int_to_ptr.hbm [resolvable:$true] %s45
      %s47 = sshll.u32 [#allocation7], 4
      %s48 = int_to_ptr.vmem [resolvable:$true] %s47
      %50 = dma.hbm_to_vmem [thread:$0]  %s46, 128, %s48, [#allocation6]
    $region13: #{tpu_custom_call.1} parent=1 // pred_fallthru
      _
    // Predicated region
    $region14: #{tpu_custom_call.1} parent=1 // pred_check
      _
    $region15: #{tpu_custom_call.1} parent=1 // pred_check_branch
      %52 = sbr.rel (0) target = $region17
    $region16: #{tpu_custom_call.1} parent=1 // pred_region
      %54 = vsyncadd [#allocation9], 0
      %s55 = sshll.u32 %s3, 4
      %s56 = int_to_ptr.hbm [resolvable:$true] %s55
      %s57 = sshll.u32 [#allocation8], 4
      %s58 = int_to_ptr.vmem [resolvable:$true] %s57
      %63 = dma.hbm_to_vmem [thread:$0]  %s56, 8192, %s58, [#allocation9], 64, 64, 4
    $region17: #{tpu_custom_call.1} parent=1 // pred_fallthru
      _
    // Predicated region
    $region18: #{tpu_custom_call.1} parent=1 // pred_check
      _
    $region19: #{tpu_custom_call.1} parent=1 // pred_check_branch
      %65 = sbr.rel (0) target = $region21
    $region20: #{tpu_custom_call.1} parent=1 // pred_region
      _
    $region21: #{tpu_custom_call.1} parent=1 // pred_fallthru
      _
    // Predicated region
    $region22: #{tpu_custom_call.1} parent=1 // pred_check
      _
    $region23: #{tpu_custom_call.1} parent=1 // pred_check_branch
      %67 = sbr.rel (0) target = $region25
    $region24: #{tpu_custom_call.1} parent=1 // pred_region
      %69 = dma.done [#allocation3], 512
    $region25: #{tpu_custom_call.1} parent=1 // pred_fallthru
      _
    // Predicated region
    $region26: #{tpu_custom_call.1} parent=1 // pred_check
      _
    $region27: #{tpu_custom_call.1} parent=1 // pred_check_branch
      %71 = sbr.rel (0) target = $region29
    $region28: #{tpu_custom_call.1} parent=1 // pred_region
      %73 = dma.done [#allocation6], 32768
    $region29: #{tpu_custom_call.1} parent=1 // pred_fallthru
      _
    // Predicated region
    $region30: #{tpu_custom_call.1} parent=1 // pred_check
      _
    $region31: #{tpu_custom_call.1} parent=1 // pred_check_branch
      %75 = sbr.rel (0) target = $region33
    $region32: #{tpu_custom_call.1} parent=1 // pred_region
      %77 = dma.done [#allocation6], 128
    $region33: #{tpu_custom_call.1} parent=1 // pred_fallthru
      _
    // Predicated region
    $region34: #{tpu_custom_call.1} parent=1 // pred_check
      _
    $region35: #{tpu_custom_call.1} parent=1 // pred_check_branch
      %79 = sbr.rel (0) target = $region37
    $region36: #{tpu_custom_call.1} parent=1 // pred_region
      %81 = dma.done [#allocation9], 8192
    $region37: #{tpu_custom_call.1} parent=1 // pred_fallthru
      _
    %v82 = vld [vmem:[#allocation2] sm:$0xff]
    %v83 = vld [vmem:[#allocation2 + $0x8] sm:$0xff]
    %v84 = vld [vmem:[#allocation2 + $0x10] sm:$0xff]
    %v85 = vld [vmem:[#allocation2 + $0x18] sm:$0xff]
    %v86 = vld [vmem:[#allocation5] sm:$0xff]
    %v87 = vld [vmem:[#allocation5 + $0x8] sm:$0xff]
    %v88 = vld [vmem:[#allocation5 + $0x10] sm:$0xff]
    %v89 = vld [vmem:[#allocation5 + $0x18] sm:$0xff]
    %v90 = vld [vmem:[#allocation5 + $0x20] sm:$0xff]
    %v91 = vld [vmem:[#allocation5 + $0x28] sm:$0xff]
    %v92 = vld [vmem:[#allocation5 + $0x30] sm:$0xff]
    %v93 = vld [vmem:[#allocation5 + $0x38] sm:$0xff]
    %v94 = vld [vmem:[#allocation5 + $0x40] sm:$0xff]
    %v95 = vld [vmem:[#allocation5 + $0x48] sm:$0xff]
    %v96 = vld [vmem:[#allocation5 + $0x50] sm:$0xff]
    %v97 = vld [vmem:[#allocation5 + $0x58] sm:$0xff]
    %v98 = vld [vmem:[#allocation5 + $0x60] sm:$0xff]
    %v99 = vld [vmem:[#allocation5 + $0x68] sm:$0xff]
    %v100 = vld [vmem:[#allocation5 + $0x70] sm:$0xff]
    %v101 = vld [vmem:[#allocation5 + $0x78] sm:$0xff]
    %v102 = vld [vmem:[#allocation5 + $0x80] sm:$0xff]
    %v103 = vld [vmem:[#allocation5 + $0x88] sm:$0xff]
    %v104 = vld [vmem:[#allocation5 + $0x90] sm:$0xff]
    %v105 = vld [vmem:[#allocation5 + $0x98] sm:$0xff]
    %v106 = vld [vmem:[#allocation5 + $0xa0] sm:$0xff]
    %v107 = vld [vmem:[#allocation5 + $0xa8] sm:$0xff]
    %v108 = vld [vmem:[#allocation5 + $0xb0] sm:$0xff]
    %v109 = vld [vmem:[#allocation5 + $0xb8] sm:$0xff]
    %v110 = vld [vmem:[#allocation5 + $0xc0] sm:$0xff]
    %v111 = vld [vmem:[#allocation5 + $0xc8] sm:$0xff]
    %v112 = vld [vmem:[#allocation5 + $0xd0] sm:$0xff]
    %v113 = vld [vmem:[#allocation5 + $0xd8] sm:$0xff]
    %v114 = vld [vmem:[#allocation5 + $0xe0] sm:$0xff]
    %v115 = vld [vmem:[#allocation5 + $0xe8] sm:$0xff]
    %v116 = vld [vmem:[#allocation5 + $0xf0] sm:$0xff]
    %v117 = vld [vmem:[#allocation5 + $0xf8] sm:$0xff]
    %v118 = vld [vmem:[#allocation5 + $0x100] sm:$0xff]
    %v119 = vld [vmem:[#allocation5 + $0x108] sm:$0xff]
    %v120 = vld [vmem:[#allocation5 + $0x110] sm:$0xff]
    %v121 = vld [vmem:[#allocation5 + $0x118] sm:$0xff]
    %v122 = vld [vmem:[#allocation5 + $0x120] sm:$0xff]
    %v123 = vld [vmem:[#allocation5 + $0x128] sm:$0xff]
    %v124 = vld [vmem:[#allocation5 + $0x130] sm:$0xff]
    %v125 = vld [vmem:[#allocation5 + $0x138] sm:$0xff]
    %v126 = vld [vmem:[#allocation5 + $0x140] sm:$0xff]
    %v127 = vld [vmem:[#allocation5 + $0x148] sm:$0xff]
    %v128 = vld [vmem:[#allocation5 + $0x150] sm:$0xff]
    %v129 = vld [vmem:[#allocation5 + $0x158] sm:$0xff]
    %v130 = vld [vmem:[#allocation5 + $0x160] sm:$0xff]
    %v131 = vld [vmem:[#allocation5 + $0x168] sm:$0xff]
    %v132 = vld [vmem:[#allocation5 + $0x170] sm:$0xff]
    %v133 = vld [vmem:[#allocation5 + $0x178] sm:$0xff]
    %v134 = vld [vmem:[#allocation5 + $0x180] sm:$0xff]
    %v135 = vld [vmem:[#allocation5 + $0x188] sm:$0xff]
    %v136 = vld [vmem:[#allocation5 + $0x190] sm:$0xff]
    %v137 = vld [vmem:[#allocation5 + $0x198] sm:$0xff]
    %v138 = vld [vmem:[#allocation5 + $0x1a0] sm:$0xff]
    %v139 = vld [vmem:[#allocation5 + $0x1a8] sm:$0xff]
    %v140 = vld [vmem:[#allocation5 + $0x1b0] sm:$0xff]
    %v141 = vld [vmem:[#allocation5 + $0x1b8] sm:$0xff]
    %v142 = vld [vmem:[#allocation5 + $0x1c0] sm:$0xff]
    %v143 = vld [vmem:[#allocation5 + $0x1c8] sm:$0xff]
    %v144 = vld [vmem:[#allocation5 + $0x1d0] sm:$0xff]
    %v145 = vld [vmem:[#allocation5 + $0x1d8] sm:$0xff]
    %v146 = vld [vmem:[#allocation5 + $0x1e0] sm:$0xff]
    %v147 = vld [vmem:[#allocation5 + $0x1e8] sm:$0xff]
    %v148 = vld [vmem:[#allocation5 + $0x1f0] sm:$0xff]
    %v149 = vld [vmem:[#allocation5 + $0x1f8] sm:$0xff]
    %v150 = vld [vmem:[#allocation5 + $0x200] sm:$0xff]
    %v151 = vld [vmem:[#allocation5 + $0x208] sm:$0xff]
    %v152 = vld [vmem:[#allocation5 + $0x210] sm:$0xff]
    %v153 = vld [vmem:[#allocation5 + $0x218] sm:$0xff]
    %v154 = vld [vmem:[#allocation5 + $0x220] sm:$0xff]
    %v155 = vld [vmem:[#allocation5 + $0x228] sm:$0xff]
    %v156 = vld [vmem:[#allocation5 + $0x230] sm:$0xff]
    %v157 = vld [vmem:[#allocation5 + $0x238] sm:$0xff]
    %v158 = vld [vmem:[#allocation5 + $0x240] sm:$0xff]
    %v159 = vld [vmem:[#allocation5 + $0x248] sm:$0xff]
    %v160 = vld [vmem:[#allocation5 + $0x250] sm:$0xff]
    %v161 = vld [vmem:[#allocation5 + $0x258] sm:$0xff]
    %v162 = vld [vmem:[#allocation5 + $0x260] sm:$0xff]
    %v163 = vld [vmem:[#allocation5 + $0x268] sm:$0xff]
    %v164 = vld [vmem:[#allocation5 + $0x270] sm:$0xff]
    %v165 = vld [vmem:[#allocation5 + $0x278] sm:$0xff]
    %v166 = vld [vmem:[#allocation5 + $0x280] sm:$0xff]
    %v167 = vld [vmem:[#allocation5 + $0x288] sm:$0xff]
    %v168 = vld [vmem:[#allocation5 + $0x290] sm:$0xff]
    %v169 = vld [vmem:[#allocation5 + $0x298] sm:$0xff]
    %v170 = vld [vmem:[#allocation5 + $0x2a0] sm:$0xff]
    %v171 = vld [vmem:[#allocation5 + $0x2a8] sm:$0xff]
    %v172 = vld [vmem:[#allocation5 + $0x2b0] sm:$0xff]
    %v173 = vld [vmem:[#allocation5 + $0x2b8] sm:$0xff]
    %v174 = vld [vmem:[#allocation5 + $0x2c0] sm:$0xff]
    %v175 = vld [vmem:[#allocation5 + $0x2c8] sm:$0xff]
    %v176 = vld [vmem:[#allocation5 + $0x2d0] sm:$0xff]
    %v177 = vld [vmem:[#allocation5 + $0x2d8] sm:$0xff]
    %v178 = vld [vmem:[#allocation5 + $0x2e0] sm:$0xff]
    %v179 = vld [vmem:[#allocation5 + $0x2e8] sm:$0xff]
    %v180 = vld [vmem:[#allocation5 + $0x2f0] sm:$0xff]
    %v181 = vld [vmem:[#allocation5 + $0x2f8] sm:$0xff]
    %v182 = vld [vmem:[#allocation5 + $0x300] sm:$0xff]
    %v183 = vld [vmem:[#allocation5 + $0x308] sm:$0xff]
    %v184 = vld [vmem:[#allocation5 + $0x310] sm:$0xff]
    %v185 = vld [vmem:[#allocation5 + $0x318] sm:$0xff]
    %v186 = vld [vmem:[#allocation5 + $0x320] sm:$0xff]
    %v187 = vld [vmem:[#allocation5 + $0x328] sm:$0xff]
    %v188 = vld [vmem:[#allocation5 + $0x330] sm:$0xff]
    %v189 = vld [vmem:[#allocation5 + $0x338] sm:$0xff]
    %v190 = vld [vmem:[#allocation5 + $0x340] sm:$0xff]
    %v191 = vld [vmem:[#allocation5 + $0x348] sm:$0xff]
    %v192 = vld [vmem:[#allocation5 + $0x350] sm:$0xff]
    %v193 = vld [vmem:[#allocation5 + $0x358] sm:$0xff]
    %v194 = vld [vmem:[#allocation5 + $0x360] sm:$0xff]
    %v195 = vld [vmem:[#allocation5 + $0x368] sm:$0xff]
    %v196 = vld [vmem:[#allocation5 + $0x370] sm:$0xff]
    %v197 = vld [vmem:[#allocation5 + $0x378] sm:$0xff]
    %v198 = vld [vmem:[#allocation5 + $0x380] sm:$0xff]
    %v199 = vld [vmem:[#allocation5 + $0x388] sm:$0xff]
    %v200 = vld [vmem:[#allocation5 + $0x390] sm:$0xff]
    %v201 = vld [vmem:[#allocation5 + $0x398] sm:$0xff]
    %v202 = vld [vmem:[#allocation5 + $0x3a0] sm:$0xff]
    %v203 = vld [vmem:[#allocation5 + $0x3a8] sm:$0xff]
    %v204 = vld [vmem:[#allocation5 + $0x3b0] sm:$0xff]
    %v205 = vld [vmem:[#allocation5 + $0x3b8] sm:$0xff]
    %v206 = vld [vmem:[#allocation5 + $0x3c0] sm:$0xff]
    %v207 = vld [vmem:[#allocation5 + $0x3c8] sm:$0xff]
    %v208 = vld [vmem:[#allocation5 + $0x3d0] sm:$0xff]
    %v209 = vld [vmem:[#allocation5 + $0x3d8] sm:$0xff]
    %v210 = vld [vmem:[#allocation5 + $0x3e0] sm:$0xff]
    %v211 = vld [vmem:[#allocation5 + $0x3e8] sm:$0xff]
    %v212 = vld [vmem:[#allocation5 + $0x3f0] sm:$0xff]
    %v213 = vld [vmem:[#allocation5 + $0x3f8] sm:$0xff]
    %v214 = vld [vmem:[#allocation5 + $0x400] sm:$0xff]
    %v215 = vld [vmem:[#allocation5 + $0x408] sm:$0xff]
    %v216 = vld [vmem:[#allocation5 + $0x410] sm:$0xff]
    %v217 = vld [vmem:[#allocation5 + $0x418] sm:$0xff]
    %v218 = vld [vmem:[#allocation5 + $0x420] sm:$0xff]
    %v219 = vld [vmem:[#allocation5 + $0x428] sm:$0xff]
    %v220 = vld [vmem:[#allocation5 + $0x430] sm:$0xff]
    %v221 = vld [vmem:[#allocation5 + $0x438] sm:$0xff]
    %v222 = vld [vmem:[#allocation5 + $0x440] sm:$0xff]
    %v223 = vld [vmem:[#allocation5 + $0x448] sm:$0xff]
    %v224 = vld [vmem:[#allocation5 + $0x450] sm:$0xff]
    %v225 = vld [vmem:[#allocation5 + $0x458] sm:$0xff]
    %v226 = vld [vmem:[#allocation5 + $0x460] sm:$0xff]
    %v227 = vld [vmem:[#allocation5 + $0x468] sm:$0xff]
    %v228 = vld [vmem:[#allocation5 + $0x470] sm:$0xff]
    %v229 = vld [vmem:[#allocation5 + $0x478] sm:$0xff]
    %v230 = vld [vmem:[#allocation5 + $0x480] sm:$0xff]
    %v231 = vld [vmem:[#allocation5 + $0x488] sm:$0xff]
    %v232 = vld [vmem:[#allocation5 + $0x490] sm:$0xff]
    %v233 = vld [vmem:[#allocation5 + $0x498] sm:$0xff]
    %v234 = vld [vmem:[#allocation5 + $0x4a0] sm:$0xff]
    %v235 = vld [vmem:[#allocation5 + $0x4a8] sm:$0xff]
    %v236 = vld [vmem:[#allocation5 + $0x4b0] sm:$0xff]
    %v237 = vld [vmem:[#allocation5 + $0x4b8] sm:$0xff]
    %v238 = vld [vmem:[#allocation5 + $0x4c0] sm:$0xff]
    %v239 = vld [vmem:[#allocation5 + $0x4c8] sm:$0xff]
    %v240 = vld [vmem:[#allocation5 + $0x4d0] sm:$0xff]
    %v241 = vld [vmem:[#allocation5 + $0x4d8] sm:$0xff]
    %v242 = vld [vmem:[#allocation5 + $0x4e0] sm:$0xff]
    %v243 = vld [vmem:[#allocation5 + $0x4e8] sm:$0xff]
    %v244 = vld [vmem:[#allocation5 + $0x4f0] sm:$0xff]
    %v245 = vld [vmem:[#allocation5 + $0x4f8] sm:$0xff]
    %v246 = vld [vmem:[#allocation5 + $0x500] sm:$0xff]
    %v247 = vld [vmem:[#allocation5 + $0x508] sm:$0xff]
    %v248 = vld [vmem:[#allocation5 + $0x510] sm:$0xff]
    %v249 = vld [vmem:[#allocation5 + $0x518] sm:$0xff]
    %v250 = vld [vmem:[#allocation5 + $0x520] sm:$0xff]
    %v251 = vld [vmem:[#allocation5 + $0x528] sm:$0xff]
    %v252 = vld [vmem:[#allocation5 + $0x530] sm:$0xff]
    %v253 = vld [vmem:[#allocation5 + $0x538] sm:$0xff]
    %v254 = vld [vmem:[#allocation5 + $0x540] sm:$0xff]
    %v255 = vld [vmem:[#allocation5 + $0x548] sm:$0xff]
    %v256 = vld [vmem:[#allocation5 + $0x550] sm:$0xff]
    %v257 = vld [vmem:[#allocation5 + $0x558] sm:$0xff]
    %v258 = vld [vmem:[#allocation5 + $0x560] sm:$0xff]
    %v259 = vld [vmem:[#allocation5 + $0x568] sm:$0xff]
    %v260 = vld [vmem:[#allocation5 + $0x570] sm:$0xff]
    %v261 = vld [vmem:[#allocation5 + $0x578] sm:$0xff]
    %v262 = vld [vmem:[#allocation5 + $0x580] sm:$0xff]
    %v263 = vld [vmem:[#allocation5 + $0x588] sm:$0xff]
    %v264 = vld [vmem:[#allocation5 + $0x590] sm:$0xff]
    %v265 = vld [vmem:[#allocation5 + $0x598] sm:$0xff]
    %v266 = vld [vmem:[#allocation5 + $0x5a0] sm:$0xff]
    %v267 = vld [vmem:[#allocation5 + $0x5a8] sm:$0xff]
    %v268 = vld [vmem:[#allocation5 + $0x5b0] sm:$0xff]
    %v269 = vld [vmem:[#allocation5 + $0x5b8] sm:$0xff]
    %v270 = vld [vmem:[#allocation5 + $0x5c0] sm:$0xff]
    %v271 = vld [vmem:[#allocation5 + $0x5c8] sm:$0xff]
    %v272 = vld [vmem:[#allocation5 + $0x5d0] sm:$0xff]
    %v273 = vld [vmem:[#allocation5 + $0x5d8] sm:$0xff]
    %v274 = vld [vmem:[#allocation5 + $0x5e0] sm:$0xff]
    %v275 = vld [vmem:[#allocation5 + $0x5e8] sm:$0xff]
    %v276 = vld [vmem:[#allocation5 + $0x5f0] sm:$0xff]
    %v277 = vld [vmem:[#allocation5 + $0x5f8] sm:$0xff]
    %v278 = vld [vmem:[#allocation5 + $0x600] sm:$0xff]
    %v279 = vld [vmem:[#allocation5 + $0x608] sm:$0xff]
    %v280 = vld [vmem:[#allocation5 + $0x610] sm:$0xff]
    %v281 = vld [vmem:[#allocation5 + $0x618] sm:$0xff]
    %v282 = vld [vmem:[#allocation5 + $0x620] sm:$0xff]
    %v283 = vld [vmem:[#allocation5 + $0x628] sm:$0xff]
    %v284 = vld [vmem:[#allocation5 + $0x630] sm:$0xff]
    %v285 = vld [vmem:[#allocation5 + $0x638] sm:$0xff]
    %v286 = vld [vmem:[#allocation5 + $0x640] sm:$0xff]
    %v287 = vld [vmem:[#allocation5 + $0x648] sm:$0xff]
    %v288 = vld [vmem:[#allocation5 + $0x650] sm:$0xff]
    %v289 = vld [vmem:[#allocation5 + $0x658] sm:$0xff]
    %v290 = vld [vmem:[#allocation5 + $0x660] sm:$0xff]
    %v291 = vld [vmem:[#allocation5 + $0x668] sm:$0xff]
    %v292 = vld [vmem:[#allocation5 + $0x670] sm:$0xff]
    %v293 = vld [vmem:[#allocation5 + $0x678] sm:$0xff]
    %v294 = vld [vmem:[#allocation5 + $0x680] sm:$0xff]
    %v295 = vld [vmem:[#allocation5 + $0x688] sm:$0xff]
    %v296 = vld [vmem:[#allocation5 + $0x690] sm:$0xff]
    %v297 = vld [vmem:[#allocation5 + $0x698] sm:$0xff]
    %v298 = vld [vmem:[#allocation5 + $0x6a0] sm:$0xff]
    %v299 = vld [vmem:[#allocation5 + $0x6a8] sm:$0xff]
    %v300 = vld [vmem:[#allocation5 + $0x6b0] sm:$0xff]
    %v301 = vld [vmem:[#allocation5 + $0x6b8] sm:$0xff]
    %v302 = vld [vmem:[#allocation5 + $0x6c0] sm:$0xff]
    %v303 = vld [vmem:[#allocation5 + $0x6c8] sm:$0xff]
    %v304 = vld [vmem:[#allocation5 + $0x6d0] sm:$0xff]
    %v305 = vld [vmem:[#allocation5 + $0x6d8] sm:$0xff]
    %v306 = vld [vmem:[#allocation5 + $0x6e0] sm:$0xff]
    %v307 = vld [vmem:[#allocation5 + $0x6e8] sm:$0xff]
    %v308 = vld [vmem:[#allocation5 + $0x6f0] sm:$0xff]
    %v309 = vld [vmem:[#allocation5 + $0x6f8] sm:$0xff]
    %v310 = vld [vmem:[#allocation5 + $0x700] sm:$0xff]
    %v311 = vld [vmem:[#allocation5 + $0x708] sm:$0xff]
    %v312 = vld [vmem:[#allocation5 + $0x710] sm:$0xff]
    %v313 = vld [vmem:[#allocation5 + $0x718] sm:$0xff]
    %v314 = vld [vmem:[#allocation5 + $0x720] sm:$0xff]
    %v315 = vld [vmem:[#allocation5 + $0x728] sm:$0xff]
    %v316 = vld [vmem:[#allocation5 + $0x730] sm:$0xff]
    %v317 = vld [vmem:[#allocation5 + $0x738] sm:$0xff]
    %v318 = vld [vmem:[#allocation5 + $0x740] sm:$0xff]
    %v319 = vld [vmem:[#allocation5 + $0x748] sm:$0xff]
    %v320 = vld [vmem:[#allocation5 + $0x750] sm:$0xff]
    %v321 = vld [vmem:[#allocation5 + $0x758] sm:$0xff]
    %v322 = vld [vmem:[#allocation5 + $0x760] sm:$0xff]
    %v323 = vld [vmem:[#allocation5 + $0x768] sm:$0xff]
    %v324 = vld [vmem:[#allocation5 + $0x770] sm:$0xff]
    %v325 = vld [vmem:[#allocation5 + $0x778] sm:$0xff]
    %v326 = vld [vmem:[#allocation5 + $0x780] sm:$0xff]
    %v327 = vld [vmem:[#allocation5 + $0x788] sm:$0xff]
    %v328 = vld [vmem:[#allocation5 + $0x790] sm:$0xff]
    %v329 = vld [vmem:[#allocation5 + $0x798] sm:$0xff]
    %v330 = vld [vmem:[#allocation5 + $0x7a0] sm:$0xff]
    %v331 = vld [vmem:[#allocation5 + $0x7a8] sm:$0xff]
    %v332 = vld [vmem:[#allocation5 + $0x7b0] sm:$0xff]
    %v333 = vld [vmem:[#allocation5 + $0x7b8] sm:$0xff]
    %v334 = vld [vmem:[#allocation5 + $0x7c0] sm:$0xff]
    %v335 = vld [vmem:[#allocation5 + $0x7c8] sm:$0xff]
    %v336 = vld [vmem:[#allocation5 + $0x7d0] sm:$0xff]
    %v337 = vld [vmem:[#allocation5 + $0x7d8] sm:$0xff]
    %v338 = vld [vmem:[#allocation5 + $0x7e0] sm:$0xff]
    %v339 = vld [vmem:[#allocation5 + $0x7e8] sm:$0xff]
    %v340 = vld [vmem:[#allocation5 + $0x7f0] sm:$0xff]
    %v341 = vld [vmem:[#allocation5 + $0x7f8] sm:$0xff]
    %v342 = vld [vmem:[#allocation7] sm:$0xff]
    %v344 = vperm.slane %v342, 0
    %v345 = vperm.slane %v342, 1
    %v346 = vperm.slane %v342, 2
    %v347 = vperm.slane %v342, 3
    %v348 = vperm.slane %v342, 4
    %v349 = vperm.slane %v342, 5
    %v350 = vperm.slane %v342, 6
    %v351 = vperm.slane %v342, 7
    %v364 = vunpack.c.l.b16 %v82
    %v365 = vunpack.c.h.b16 %v82
    %v366 = vunpack.c.l.b16 %v83
    %v367 = vunpack.c.h.b16 %v83
    %v368 = vunpack.c.l.b16 %v84
    %v369 = vunpack.c.h.b16 %v84
    %v370 = vunpack.c.l.b16 %v85
    %v371 = vunpack.c.h.b16 %v85
    %v372 = vpack.c.b16 %v368, %v364
    %v373 = vpack.c.b16 %v369, %v365
    %v374 = vpack.c.b16 %v370, %v366
    %v375 = vpack.c.b16 %v371, %v367
    %v636 = vunpack.c.l.b16 %v86
    %v637 = vunpack.c.h.b16 %v86
    %v638 = vunpack.c.l.b16 %v87
    %v639 = vunpack.c.h.b16 %v87
    %v640 = vunpack.c.l.b16 %v88
    %v641 = vunpack.c.h.b16 %v88
    %v642 = vunpack.c.l.b16 %v89
    %v643 = vunpack.c.h.b16 %v89
    %v644 = vunpack.c.l.b16 %v90
    %v645 = vunpack.c.h.b16 %v90
    %v646 = vunpack.c.l.b16 %v91
    %v647 = vunpack.c.h.b16 %v91
    %v648 = vunpack.c.l.b16 %v92
    %v649 = vunpack.c.h.b16 %v92
    %v650 = vunpack.c.l.b16 %v93
    %v651 = vunpack.c.h.b16 %v93
    %v652 = vunpack.c.l.b16 %v94
    %v653 = vunpack.c.h.b16 %v94
    %v654 = vunpack.c.l.b16 %v95
    %v655 = vunpack.c.h.b16 %v95
    %v656 = vunpack.c.l.b16 %v96
    %v657 = vunpack.c.h.b16 %v96
    %v658 = vunpack.c.l.b16 %v97
    %v659 = vunpack.c.h.b16 %v97
    %v660 = vunpack.c.l.b16 %v98
    %v661 = vunpack.c.h.b16 %v98
    %v662 = vunpack.c.l.b16 %v99
    %v663 = vunpack.c.h.b16 %v99
    %v664 = vunpack.c.l.b16 %v100
    %v665 = vunpack.c.h.b16 %v100
    %v666 = vunpack.c.l.b16 %v101
    %v667 = vunpack.c.h.b16 %v101
    %v668 = vunpack.c.l.b16 %v102
    %v669 = vunpack.c.h.b16 %v102
    %v670 = vunpack.c.l.b16 %v103
    %v671 = vunpack.c.h.b16 %v103
    %v672 = vunpack.c.l.b16 %v104
    %v673 = vunpack.c.h.b16 %v104
    %v674 = vunpack.c.l.b16 %v105
    %v675 = vunpack.c.h.b16 %v105
    %v676 = vunpack.c.l.b16 %v106
    %v677 = vunpack.c.h.b16 %v106
    %v678 = vunpack.c.l.b16 %v107
    %v679 = vunpack.c.h.b16 %v107
    %v680 = vunpack.c.l.b16 %v108
    %v681 = vunpack.c.h.b16 %v108
    %v682 = vunpack.c.l.b16 %v109
    %v683 = vunpack.c.h.b16 %v109
    %v684 = vunpack.c.l.b16 %v110
    %v685 = vunpack.c.h.b16 %v110
    %v686 = vunpack.c.l.b16 %v111
    %v687 = vunpack.c.h.b16 %v111
    %v688 = vunpack.c.l.b16 %v112
    %v689 = vunpack.c.h.b16 %v112
    %v690 = vunpack.c.l.b16 %v113
    %v691 = vunpack.c.h.b16 %v113
    %v692 = vunpack.c.l.b16 %v114
    %v693 = vunpack.c.h.b16 %v114
    %v694 = vunpack.c.l.b16 %v115
    %v695 = vunpack.c.h.b16 %v115
    %v696 = vunpack.c.l.b16 %v116
    %v697 = vunpack.c.h.b16 %v116
    %v698 = vunpack.c.l.b16 %v117
    %v699 = vunpack.c.h.b16 %v117
    %v700 = vunpack.c.l.b16 %v118
    %v701 = vunpack.c.h.b16 %v118
    %v702 = vunpack.c.l.b16 %v119
    %v703 = vunpack.c.h.b16 %v119
    %v704 = vunpack.c.l.b16 %v120
    %v705 = vunpack.c.h.b16 %v120
    %v706 = vunpack.c.l.b16 %v121
    %v707 = vunpack.c.h.b16 %v121
    %v708 = vunpack.c.l.b16 %v122
    %v709 = vunpack.c.h.b16 %v122
    %v710 = vunpack.c.l.b16 %v123
    %v711 = vunpack.c.h.b16 %v123
    %v712 = vunpack.c.l.b16 %v124
    %v713 = vunpack.c.h.b16 %v124
    %v714 = vunpack.c.l.b16 %v125
    %v715 = vunpack.c.h.b16 %v125
    %v716 = vunpack.c.l.b16 %v126
    %v717 = vunpack.c.h.b16 %v126
    %v718 = vunpack.c.l.b16 %v127
    %v719 = vunpack.c.h.b16 %v127
    %v720 = vunpack.c.l.b16 %v128
    %v721 = vunpack.c.h.b16 %v128
    %v722 = vunpack.c.l.b16 %v129
    %v723 = vunpack.c.h.b16 %v129
    %v724 = vunpack.c.l.b16 %v130
    %v725 = vunpack.c.h.b16 %v130
    %v726 = vunpack.c.l.b16 %v131
    %v727 = vunpack.c.h.b16 %v131
    %v728 = vunpack.c.l.b16 %v132
    %v729 = vunpack.c.h.b16 %v132
    %v730 = vunpack.c.l.b16 %v133
    %v731 = vunpack.c.h.b16 %v133
    %v732 = vunpack.c.l.b16 %v134
    %v733 = vunpack.c.h.b16 %v134
    %v734 = vunpack.c.l.b16 %v135
    %v735 = vunpack.c.h.b16 %v135
    %v736 = vunpack.c.l.b16 %v136
    %v737 = vunpack.c.h.b16 %v136
    %v738 = vunpack.c.l.b16 %v137
    %v739 = vunpack.c.h.b16 %v137
    %v740 = vunpack.c.l.b16 %v138
    %v741 = vunpack.c.h.b16 %v138
    %v742 = vunpack.c.l.b16 %v139
    %v743 = vunpack.c.h.b16 %v139
    %v744 = vunpack.c.l.b16 %v140
    %v745 = vunpack.c.h.b16 %v140
    %v746 = vunpack.c.l.b16 %v141
    %v747 = vunpack.c.h.b16 %v141
    %v748 = vunpack.c.l.b16 %v142
    %v749 = vunpack.c.h.b16 %v142
    %v750 = vunpack.c.l.b16 %v143
    %v751 = vunpack.c.h.b16 %v143
    %v752 = vunpack.c.l.b16 %v144
    %v753 = vunpack.c.h.b16 %v144
    %v754 = vunpack.c.l.b16 %v145
    %v755 = vunpack.c.h.b16 %v145
    %v756 = vunpack.c.l.b16 %v146
    %v757 = vunpack.c.h.b16 %v146
    %v758 = vunpack.c.l.b16 %v147
    %v759 = vunpack.c.h.b16 %v147
    %v760 = vunpack.c.l.b16 %v148
    %v761 = vunpack.c.h.b16 %v148
    %v762 = vunpack.c.l.b16 %v149
    %v763 = vunpack.c.h.b16 %v149
    %v764 = vunpack.c.l.b16 %v150
    %v765 = vunpack.c.h.b16 %v150
    %v766 = vunpack.c.l.b16 %v151
    %v767 = vunpack.c.h.b16 %v151
    %v768 = vunpack.c.l.b16 %v152
    %v769 = vunpack.c.h.b16 %v152
    %v770 = vunpack.c.l.b16 %v153
    %v771 = vunpack.c.h.b16 %v153
    %v772 = vunpack.c.l.b16 %v154
    %v773 = vunpack.c.h.b16 %v154
    %v774 = vunpack.c.l.b16 %v155
    %v775 = vunpack.c.h.b16 %v155
    %v776 = vunpack.c.l.b16 %v156
    %v777 = vunpack.c.h.b16 %v156
    %v778 = vunpack.c.l.b16 %v157
    %v779 = vunpack.c.h.b16 %v157
    %v780 = vunpack.c.l.b16 %v158
    %v781 = vunpack.c.h.b16 %v158
    %v782 = vunpack.c.l.b16 %v159
    %v783 = vunpack.c.h.b16 %v159
    %v784 = vunpack.c.l.b16 %v160
    %v785 = vunpack.c.h.b16 %v160
    %v786 = vunpack.c.l.b16 %v161
    %v787 = vunpack.c.h.b16 %v161
    %v788 = vunpack.c.l.b16 %v162
    %v789 = vunpack.c.h.b16 %v162
    %v790 = vunpack.c.l.b16 %v163
    %v791 = vunpack.c.h.b16 %v163
    %v792 = vunpack.c.l.b16 %v164
    %v793 = vunpack.c.h.b16 %v164
    %v794 = vunpack.c.l.b16 %v165
    %v795 = vunpack.c.h.b16 %v165
    %v796 = vunpack.c.l.b16 %v166
    %v797 = vunpack.c.h.b16 %v166
    %v798 = vunpack.c.l.b16 %v167
    %v799 = vunpack.c.h.b16 %v167
    %v800 = vunpack.c.l.b16 %v168
    %v801 = vunpack.c.h.b16 %v168
    %v802 = vunpack.c.l.b16 %v169
    %v803 = vunpack.c.h.b16 %v169
    %v804 = vunpack.c.l.b16 %v170
    %v805 = vunpack.c.h.b16 %v170
    %v806 = vunpack.c.l.b16 %v171
    %v807 = vunpack.c.h.b16 %v171
    %v808 = vunpack.c.l.b16 %v172
    %v809 = vunpack.c.h.b16 %v172
    %v810 = vunpack.c.l.b16 %v173
    %v811 = vunpack.c.h.b16 %v173
    %v812 = vunpack.c.l.b16 %v174
    %v813 = vunpack.c.h.b16 %v174
    %v814 = vunpack.c.l.b16 %v175
    %v815 = vunpack.c.h.b16 %v175
    %v816 = vunpack.c.l.b16 %v176
    %v817 = vunpack.c.h.b16 %v176
    %v818 = vunpack.c.l.b16 %v177
    %v819 = vunpack.c.h.b16 %v177
    %v820 = vunpack.c.l.b16 %v178
    %v821 = vunpack.c.h.b16 %v178
    %v822 = vunpack.c.l.b16 %v179
    %v823 = vunpack.c.h.b16 %v179
    %v824 = vunpack.c.l.b16 %v180
    %v825 = vunpack.c.h.b16 %v180
    %v826 = vunpack.c.l.b16 %v181
    %v827 = vunpack.c.h.b16 %v181
    %v828 = vunpack.c.l.b16 %v182
    %v829 = vunpack.c.h.b16 %v182
    %v830 = vunpack.c.l.b16 %v183
    %v831 = vunpack.c.h.b16 %v183
    %v832 = vunpack.c.l.b16 %v184
    %v833 = vunpack.c.h.b16 %v184
    %v834 = vunpack.c.l.b16 %v185
    %v835 = vunpack.c.h.b16 %v185
    %v836 = vunpack.c.l.b16 %v186
    %v837 = vunpack.c.h.b16 %v186
    %v838 = vunpack.c.l.b16 %v187
    %v839 = vunpack.c.h.b16 %v187
    %v840 = vunpack.c.l.b16 %v188
    %v841 = vunpack.c.h.b16 %v188
    %v842 = vunpack.c.l.b16 %v189
    %v843 = vunpack.c.h.b16 %v189
    %v844 = vunpack.c.l.b16 %v190
    %v845 = vunpack.c.h.b16 %v190
    %v846 = vunpack.c.l.b16 %v191
    %v847 = vunpack.c.h.b16 %v191
    %v848 = vunpack.c.l.b16 %v192
    %v849 = vunpack.c.h.b16 %v192
    %v850 = vunpack.c.l.b16 %v193
    %v851 = vunpack.c.h.b16 %v193
    %v852 = vunpack.c.l.b16 %v194
    %v853 = vunpack.c.h.b16 %v194
    %v854 = vunpack.c.l.b16 %v195
    %v855 = vunpack.c.h.b16 %v195
    %v856 = vunpack.c.l.b16 %v196
    %v857 = vunpack.c.h.b16 %v196
    %v858 = vunpack.c.l.b16 %v197
    %v859 = vunpack.c.h.b16 %v197
    %v860 = vunpack.c.l.b16 %v198
    %v861 = vunpack.c.h.b16 %v198
    %v862 = vunpack.c.l.b16 %v199
    %v863 = vunpack.c.h.b16 %v199
    %v864 = vunpack.c.l.b16 %v200
    %v865 = vunpack.c.h.b16 %v200
    %v866 = vunpack.c.l.b16 %v201
    %v867 = vunpack.c.h.b16 %v201
    %v868 = vunpack.c.l.b16 %v202
    %v869 = vunpack.c.h.b16 %v202
    %v870 = vunpack.c.l.b16 %v203
    %v871 = vunpack.c.h.b16 %v203
    %v872 = vunpack.c.l.b16 %v204
    %v873 = vunpack.c.h.b16 %v204
    %v874 = vunpack.c.l.b16 %v205
    %v875 = vunpack.c.h.b16 %v205
    %v876 = vunpack.c.l.b16 %v206
    %v877 = vunpack.c.h.b16 %v206
    %v878 = vunpack.c.l.b16 %v207
    %v879 = vunpack.c.h.b16 %v207
    %v880 = vunpack.c.l.b16 %v208
    %v881 = vunpack.c.h.b16 %v208
    %v882 = vunpack.c.l.b16 %v209
    %v883 = vunpack.c.h.b16 %v209
    %v884 = vunpack.c.l.b16 %v210
    %v885 = vunpack.c.h.b16 %v210
    %v886 = vunpack.c.l.b16 %v211
    %v887 = vunpack.c.h.b16 %v211
    %v888 = vunpack.c.l.b16 %v212
    %v889 = vunpack.c.h.b16 %v212
    %v890 = vunpack.c.l.b16 %v213
    %v891 = vunpack.c.h.b16 %v213
    %v892 = vunpack.c.l.b16 %v214
    %v893 = vunpack.c.h.b16 %v214
    %v894 = vunpack.c.l.b16 %v215
    %v895 = vunpack.c.h.b16 %v215
    %v896 = vunpack.c.l.b16 %v216
    %v897 = vunpack.c.h.b16 %v216
    %v898 = vunpack.c.l.b16 %v217
    %v899 = vunpack.c.h.b16 %v217
    %v900 = vunpack.c.l.b16 %v218
    %v901 = vunpack.c.h.b16 %v218
    %v902 = vunpack.c.l.b16 %v219
    %v903 = vunpack.c.h.b16 %v219
    %v904 = vunpack.c.l.b16 %v220
    %v905 = vunpack.c.h.b16 %v220
    %v906 = vunpack.c.l.b16 %v221
    %v907 = vunpack.c.h.b16 %v221
    %v908 = vunpack.c.l.b16 %v222
    %v909 = vunpack.c.h.b16 %v222
    %v910 = vunpack.c.l.b16 %v223
    %v911 = vunpack.c.h.b16 %v223
    %v912 = vunpack.c.l.b16 %v224
    %v913 = vunpack.c.h.b16 %v224
    %v914 = vunpack.c.l.b16 %v225
    %v915 = vunpack.c.h.b16 %v225
    %v916 = vunpack.c.l.b16 %v226
    %v917 = vunpack.c.h.b16 %v226
    %v918 = vunpack.c.l.b16 %v227
    %v919 = vunpack.c.h.b16 %v227
    %v920 = vunpack.c.l.b16 %v228
    %v921 = vunpack.c.h.b16 %v228
    %v922 = vunpack.c.l.b16 %v229
    %v923 = vunpack.c.h.b16 %v229
    %v924 = vunpack.c.l.b16 %v230
    %v925 = vunpack.c.h.b16 %v230
    %v926 = vunpack.c.l.b16 %v231
    %v927 = vunpack.c.h.b16 %v231
    %v928 = vunpack.c.l.b16 %v232
    %v929 = vunpack.c.h.b16 %v232
    %v930 = vunpack.c.l.b16 %v233
    %v931 = vunpack.c.h.b16 %v233
    %v932 = vunpack.c.l.b16 %v234
    %v933 = vunpack.c.h.b16 %v234
    %v934 = vunpack.c.l.b16 %v235
    %v935 = vunpack.c.h.b16 %v235
    %v936 = vunpack.c.l.b16 %v236
    %v937 = vunpack.c.h.b16 %v236
    %v938 = vunpack.c.l.b16 %v237
    %v939 = vunpack.c.h.b16 %v237
    %v940 = vunpack.c.l.b16 %v238
    %v941 = vunpack.c.h.b16 %v238
    %v942 = vunpack.c.l.b16 %v239
    %v943 = vunpack.c.h.b16 %v239
    %v944 = vunpack.c.l.b16 %v240
    %v945 = vunpack.c.h.b16 %v240
    %v946 = vunpack.c.l.b16 %v241
    %v947 = vunpack.c.h.b16 %v241
    %v948 = vunpack.c.l.b16 %v242
    %v949 = vunpack.c.h.b16 %v242
    %v950 = vunpack.c.l.b16 %v243
    %v951 = vunpack.c.h.b16 %v243
    %v952 = vunpack.c.l.b16 %v244
    %v953 = vunpack.c.h.b16 %v244
    %v954 = vunpack.c.l.b16 %v245
    %v955 = vunpack.c.h.b16 %v245
    %v956 = vunpack.c.l.b16 %v246
    %v957 = vunpack.c.h.b16 %v246
    %v958 = vunpack.c.l.b16 %v247
    %v959 = vunpack.c.h.b16 %v247
    %v960 = vunpack.c.l.b16 %v248
    %v961 = vunpack.c.h.b16 %v248
    %v962 = vunpack.c.l.b16 %v249
    %v963 = vunpack.c.h.b16 %v249
    %v964 = vunpack.c.l.b16 %v250
    %v965 = vunpack.c.h.b16 %v250
    %v966 = vunpack.c.l.b16 %v251
    %v967 = vunpack.c.h.b16 %v251
    %v968 = vunpack.c.l.b16 %v252
    %v969 = vunpack.c.h.b16 %v252
    %v970 = vunpack.c.l.b16 %v253
    %v971 = vunpack.c.h.b16 %v253
    %v972 = vunpack.c.l.b16 %v254
    %v973 = vunpack.c.h.b16 %v254
    %v974 = vunpack.c.l.b16 %v255
    %v975 = vunpack.c.h.b16 %v255
    %v976 = vunpack.c.l.b16 %v256
    %v977 = vunpack.c.h.b16 %v256
    %v978 = vunpack.c.l.b16 %v257
    %v979 = vunpack.c.h.b16 %v257
    %v980 = vunpack.c.l.b16 %v258
    %v981 = vunpack.c.h.b16 %v258
    %v982 = vunpack.c.l.b16 %v259
    %v983 = vunpack.c.h.b16 %v259
    %v984 = vunpack.c.l.b16 %v260
    %v985 = vunpack.c.h.b16 %v260
    %v986 = vunpack.c.l.b16 %v261
    %v987 = vunpack.c.h.b16 %v261
    %v988 = vunpack.c.l.b16 %v262
    %v989 = vunpack.c.h.b16 %v262
    %v990 = vunpack.c.l.b16 %v263
    %v991 = vunpack.c.h.b16 %v263
    %v992 = vunpack.c.l.b16 %v264
    %v993 = vunpack.c.h.b16 %v264
    %v994 = vunpack.c.l.b16 %v265
    %v995 = vunpack.c.h.b16 %v265
    %v996 = vunpack.c.l.b16 %v266
    %v997 = vunpack.c.h.b16 %v266
    %v998 = vunpack.c.l.b16 %v267
    %v999 = vunpack.c.h.b16 %v267
    %v1000 = vunpack.c.l.b16 %v268
    %v1001 = vunpack.c.h.b16 %v268
    %v1002 = vunpack.c.l.b16 %v269
    %v1003 = vunpack.c.h.b16 %v269
    %v1004 = vunpack.c.l.b16 %v270
    %v1005 = vunpack.c.h.b16 %v270
    %v1006 = vunpack.c.l.b16 %v271
    %v1007 = vunpack.c.h.b16 %v271
    %v1008 = vunpack.c.l.b16 %v272
    %v1009 = vunpack.c.h.b16 %v272
    %v1010 = vunpack.c.l.b16 %v273
    %v1011 = vunpack.c.h.b16 %v273
    %v1012 = vunpack.c.l.b16 %v274
    %v1013 = vunpack.c.h.b16 %v274
    %v1014 = vunpack.c.l.b16 %v275
    %v1015 = vunpack.c.h.b16 %v275
    %v1016 = vunpack.c.l.b16 %v276
    %v1017 = vunpack.c.h.b16 %v276
    %v1018 = vunpack.c.l.b16 %v277
    %v1019 = vunpack.c.h.b16 %v277
    %v1020 = vunpack.c.l.b16 %v278
    %v1021 = vunpack.c.h.b16 %v278
    %v1022 = vunpack.c.l.b16 %v279
    %v1023 = vunpack.c.h.b16 %v279
    %v1024 = vunpack.c.l.b16 %v280
    %v1025 = vunpack.c.h.b16 %v280
    %v1026 = vunpack.c.l.b16 %v281
    %v1027 = vunpack.c.h.b16 %v281
    %v1028 = vunpack.c.l.b16 %v282
    %v1029 = vunpack.c.h.b16 %v282
    %v1030 = vunpack.c.l.b16 %v283
    %v1031 = vunpack.c.h.b16 %v283
    %v1032 = vunpack.c.l.b16 %v284
    %v1033 = vunpack.c.h.b16 %v284
    %v1034 = vunpack.c.l.b16 %v285
    %v1035 = vunpack.c.h.b16 %v285
    %v1036 = vunpack.c.l.b16 %v286
    %v1037 = vunpack.c.h.b16 %v286
    %v1038 = vunpack.c.l.b16 %v287
    %v1039 = vunpack.c.h.b16 %v287
    %v1040 = vunpack.c.l.b16 %v288
    %v1041 = vunpack.c.h.b16 %v288
    %v1042 = vunpack.c.l.b16 %v289
    %v1043 = vunpack.c.h.b16 %v289
    %v1044 = vunpack.c.l.b16 %v290
    %v1045 = vunpack.c.h.b16 %v290
    %v1046 = vunpack.c.l.b16 %v291
    %v1047 = vunpack.c.h.b16 %v291
    %v1048 = vunpack.c.l.b16 %v292
    %v1049 = vunpack.c.h.b16 %v292
    %v1050 = vunpack.c.l.b16 %v293
    %v1051 = vunpack.c.h.b16 %v293
    %v1052 = vunpack.c.l.b16 %v294
    %v1053 = vunpack.c.h.b16 %v294
    %v1054 = vunpack.c.l.b16 %v295
    %v1055 = vunpack.c.h.b16 %v295
    %v1056 = vunpack.c.l.b16 %v296
    %v1057 = vunpack.c.h.b16 %v296
    %v1058 = vunpack.c.l.b16 %v297
    %v1059 = vunpack.c.h.b16 %v297
    %v1060 = vunpack.c.l.b16 %v298
    %v1061 = vunpack.c.h.b16 %v298
    %v1062 = vunpack.c.l.b16 %v299
    %v1063 = vunpack.c.h.b16 %v299
    %v1064 = vunpack.c.l.b16 %v300
    %v1065 = vunpack.c.h.b16 %v300
    %v1066 = vunpack.c.l.b16 %v301
    %v1067 = vunpack.c.h.b16 %v301
    %v1068 = vunpack.c.l.b16 %v302
    %v1069 = vunpack.c.h.b16 %v302
    %v1070 = vunpack.c.l.b16 %v303
    %v1071 = vunpack.c.h.b16 %v303
    %v1072 = vunpack.c.l.b16 %v304
    %v1073 = vunpack.c.h.b16 %v304
    %v1074 = vunpack.c.l.b16 %v305
    %v1075 = vunpack.c.h.b16 %v305
    %v1076 = vunpack.c.l.b16 %v306
    %v1077 = vunpack.c.h.b16 %v306
    %v1078 = vunpack.c.l.b16 %v307
    %v1079 = vunpack.c.h.b16 %v307
    %v1080 = vunpack.c.l.b16 %v308
    %v1081 = vunpack.c.h.b16 %v308
    %v1082 = vunpack.c.l.b16 %v309
    %v1083 = vunpack.c.h.b16 %v309
    %v1084 = vunpack.c.l.b16 %v310
    %v1085 = vunpack.c.h.b16 %v310
    %v1086 = vunpack.c.l.b16 %v311
    %v1087 = vunpack.c.h.b16 %v311
    %v1088 = vunpack.c.l.b16 %v312
    %v1089 = vunpack.c.h.b16 %v312
    %v1090 = vunpack.c.l.b16 %v313
    %v1091 = vunpack.c.h.b16 %v313
    %v1092 = vunpack.c.l.b16 %v314
    %v1093 = vunpack.c.h.b16 %v314
    %v1094 = vunpack.c.l.b16 %v315
    %v1095 = vunpack.c.h.b16 %v315
    %v1096 = vunpack.c.l.b16 %v316
    %v1097 = vunpack.c.h.b16 %v316
    %v1098 = vunpack.c.l.b16 %v317
    %v1099 = vunpack.c.h.b16 %v317
    %v1100 = vunpack.c.l.b16 %v318
    %v1101 = vunpack.c.h.b16 %v318
    %v1102 = vunpack.c.l.b16 %v319
    %v1103 = vunpack.c.h.b16 %v319
    %v1104 = vunpack.c.l.b16 %v320
    %v1105 = vunpack.c.h.b16 %v320
    %v1106 = vunpack.c.l.b16 %v321
    %v1107 = vunpack.c.h.b16 %v321
    %v1108 = vunpack.c.l.b16 %v322
    %v1109 = vunpack.c.h.b16 %v322
    %v1110 = vunpack.c.l.b16 %v323
    %v1111 = vunpack.c.h.b16 %v323
    %v1112 = vunpack.c.l.b16 %v324
    %v1113 = vunpack.c.h.b16 %v324
    %v1114 = vunpack.c.l.b16 %v325
    %v1115 = vunpack.c.h.b16 %v325
    %v1116 = vunpack.c.l.b16 %v326
    %v1117 = vunpack.c.h.b16 %v326
    %v1118 = vunpack.c.l.b16 %v327
    %v1119 = vunpack.c.h.b16 %v327
    %v1120 = vunpack.c.l.b16 %v328
    %v1121 = vunpack.c.h.b16 %v328
    %v1122 = vunpack.c.l.b16 %v329
    %v1123 = vunpack.c.h.b16 %v329
    %v1124 = vunpack.c.l.b16 %v330
    %v1125 = vunpack.c.h.b16 %v330
    %v1126 = vunpack.c.l.b16 %v331
    %v1127 = vunpack.c.h.b16 %v331
    %v1128 = vunpack.c.l.b16 %v332
    %v1129 = vunpack.c.h.b16 %v332
    %v1130 = vunpack.c.l.b16 %v333
    %v1131 = vunpack.c.h.b16 %v333
    %v1132 = vunpack.c.l.b16 %v334
    %v1133 = vunpack.c.h.b16 %v334
    %v1134 = vunpack.c.l.b16 %v335
    %v1135 = vunpack.c.h.b16 %v335
    %v1136 = vunpack.c.l.b16 %v336
    %v1137 = vunpack.c.h.b16 %v336
    %v1138 = vunpack.c.l.b16 %v337
    %v1139 = vunpack.c.h.b16 %v337
    %v1140 = vunpack.c.l.b16 %v338
    %v1141 = vunpack.c.h.b16 %v338
    %v1142 = vunpack.c.l.b16 %v339
    %v1143 = vunpack.c.h.b16 %v339
    %v1144 = vunpack.c.l.b16 %v340
    %v1145 = vunpack.c.h.b16 %v340
    %v1146 = vunpack.c.l.b16 %v341
    %v1147 = vunpack.c.h.b16 %v341
    %v1148 = vpack.c.b16 %v644, %v636
    %v1149 = vpack.c.b16 %v645, %v637
    %v1150 = vpack.c.b16 %v646, %v638
    %v1151 = vpack.c.b16 %v647, %v639
    %v1152 = vpack.c.b16 %v648, %v640
    %v1153 = vpack.c.b16 %v649, %v641
    %v1154 = vpack.c.b16 %v650, %v642
    %v1155 = vpack.c.b16 %v651, %v643
    %v1156 = vpack.c.b16 %v660, %v652
    %v1157 = vpack.c.b16 %v661, %v653
    %v1158 = vpack.c.b16 %v662, %v654
    %v1159 = vpack.c.b16 %v663, %v655
    %v1160 = vpack.c.b16 %v664, %v656
    %v1161 = vpack.c.b16 %v665, %v657
    %v1162 = vpack.c.b16 %v666, %v658
    %v1163 = vpack.c.b16 %v667, %v659
    %v1164 = vpack.c.b16 %v676, %v668
    %v1165 = vpack.c.b16 %v677, %v669
    %v1166 = vpack.c.b16 %v678, %v670
    %v1167 = vpack.c.b16 %v679, %v671
    %v1168 = vpack.c.b16 %v680, %v672
    %v1169 = vpack.c.b16 %v681, %v673
    %v1170 = vpack.c.b16 %v682, %v674
    %v1171 = vpack.c.b16 %v683, %v675
    %v1172 = vpack.c.b16 %v692, %v684
    %v1173 = vpack.c.b16 %v693, %v685
    %v1174 = vpack.c.b16 %v694, %v686
    %v1175 = vpack.c.b16 %v695, %v687
    %v1176 = vpack.c.b16 %v696, %v688
    %v1177 = vpack.c.b16 %v697, %v689
    %v1178 = vpack.c.b16 %v698, %v690
    %v1179 = vpack.c.b16 %v699, %v691
    %v1180 = vpack.c.b16 %v708, %v700
    %v1181 = vpack.c.b16 %v709, %v701
    %v1182 = vpack.c.b16 %v710, %v702
    %v1183 = vpack.c.b16 %v711, %v703
    %v1184 = vpack.c.b16 %v712, %v704
    %v1185 = vpack.c.b16 %v713, %v705
    %v1186 = vpack.c.b16 %v714, %v706
    %v1187 = vpack.c.b16 %v715, %v707
    %v1188 = vpack.c.b16 %v724, %v716
    %v1189 = vpack.c.b16 %v725, %v717
    %v1190 = vpack.c.b16 %v726, %v718
    %v1191 = vpack.c.b16 %v727, %v719
    %v1192 = vpack.c.b16 %v728, %v720
    %v1193 = vpack.c.b16 %v729, %v721
    %v1194 = vpack.c.b16 %v730, %v722
    %v1195 = vpack.c.b16 %v731, %v723
    %v1196 = vpack.c.b16 %v740, %v732
    %v1197 = vpack.c.b16 %v741, %v733
    %v1198 = vpack.c.b16 %v742, %v734
    %v1199 = vpack.c.b16 %v743, %v735
    %v1200 = vpack.c.b16 %v744, %v736
    %v1201 = vpack.c.b16 %v745, %v737
    %v1202 = vpack.c.b16 %v746, %v738
    %v1203 = vpack.c.b16 %v747, %v739
    %v1204 = vpack.c.b16 %v756, %v748
    %v1205 = vpack.c.b16 %v757, %v749
    %v1206 = vpack.c.b16 %v758, %v750
    %v1207 = vpack.c.b16 %v759, %v751
    %v1208 = vpack.c.b16 %v760, %v752
    %v1209 = vpack.c.b16 %v761, %v753
    %v1210 = vpack.c.b16 %v762, %v754
    %v1211 = vpack.c.b16 %v763, %v755
    %v1212 = vpack.c.b16 %v772, %v764
    %v1213 = vpack.c.b16 %v773, %v765
    %v1214 = vpack.c.b16 %v774, %v766
    %v1215 = vpack.c.b16 %v775, %v767
    %v1216 = vpack.c.b16 %v776, %v768
    %v1217 = vpack.c.b16 %v777, %v769
    %v1218 = vpack.c.b16 %v778, %v770
    %v1219 = vpack.c.b16 %v779, %v771
    %v1220 = vpack.c.b16 %v788, %v780
    %v1221 = vpack.c.b16 %v789, %v781
    %v1222 = vpack.c.b16 %v790, %v782
    %v1223 = vpack.c.b16 %v791, %v783
    %v1224 = vpack.c.b16 %v792, %v784
    %v1225 = vpack.c.b16 %v793, %v785
    %v1226 = vpack.c.b16 %v794, %v786
    %v1227 = vpack.c.b16 %v795, %v787
    %v1228 = vpack.c.b16 %v804, %v796
    %v1229 = vpack.c.b16 %v805, %v797
    %v1230 = vpack.c.b16 %v806, %v798
    %v1231 = vpack.c.b16 %v807, %v799
    %v1232 = vpack.c.b16 %v808, %v800
    %v1233 = vpack.c.b16 %v809, %v801
    %v1234 = vpack.c.b16 %v810, %v802
    %v1235 = vpack.c.b16 %v811, %v803
    %v1236 = vpack.c.b16 %v820, %v812
    %v1237 = vpack.c.b16 %v821, %v813
    %v1238 = vpack.c.b16 %v822, %v814
    %v1239 = vpack.c.b16 %v823, %v815
    %v1240 = vpack.c.b16 %v824, %v816
    %v1241 = vpack.c.b16 %v825, %v817
    %v1242 = vpack.c.b16 %v826, %v818
    %v1243 = vpack.c.b16 %v827, %v819
    %v1244 = vpack.c.b16 %v836, %v828
    %v1245 = vpack.c.b16 %v837, %v829
    %v1246 = vpack.c.b16 %v838, %v830
    %v1247 = vpack.c.b16 %v839, %v831
    %v1248 = vpack.c.b16 %v840, %v832
    %v1249 = vpack.c.b16 %v841, %v833
    %v1250 = vpack.c.b16 %v842, %v834
    %v1251 = vpack.c.b16 %v843, %v835
    %v1252 = vpack.c.b16 %v852, %v844
    %v1253 = vpack.c.b16 %v853, %v845
    %v1254 = vpack.c.b16 %v854, %v846
    %v1255 = vpack.c.b16 %v855, %v847
    %v1256 = vpack.c.b16 %v856, %v848
    %v1257 = vpack.c.b16 %v857, %v849
    %v1258 = vpack.c.b16 %v858, %v850
    %v1259 = vpack.c.b16 %v859, %v851
    %v1260 = vpack.c.b16 %v868, %v860
    %v1261 = vpack.c.b16 %v869, %v861
    %v1262 = vpack.c.b16 %v870, %v862
    %v1263 = vpack.c.b16 %v871, %v863
    %v1264 = vpack.c.b16 %v872, %v864
    %v1265 = vpack.c.b16 %v873, %v865
    %v1266 = vpack.c.b16 %v874, %v866
    %v1267 = vpack.c.b16 %v875, %v867
    %v1268 = vpack.c.b16 %v884, %v876
    %v1269 = vpack.c.b16 %v885, %v877
    %v1270 = vpack.c.b16 %v886, %v878
    %v1271 = vpack.c.b16 %v887, %v879
    %v1272 = vpack.c.b16 %v888, %v880
    %v1273 = vpack.c.b16 %v889, %v881
    %v1274 = vpack.c.b16 %v890, %v882
    %v1275 = vpack.c.b16 %v891, %v883
    %v1276 = vpack.c.b16 %v900, %v892
    %v1277 = vpack.c.b16 %v901, %v893
    %v1278 = vpack.c.b16 %v902, %v894
    %v1279 = vpack.c.b16 %v903, %v895
    %v1280 = vpack.c.b16 %v904, %v896
    %v1281 = vpack.c.b16 %v905, %v897
    %v1282 = vpack.c.b16 %v906, %v898
    %v1283 = vpack.c.b16 %v907, %v899
    %v1284 = vpack.c.b16 %v916, %v908
    %v1285 = vpack.c.b16 %v917, %v909
    %v1286 = vpack.c.b16 %v918, %v910
    %v1287 = vpack.c.b16 %v919, %v911
    %v1288 = vpack.c.b16 %v920, %v912
    %v1289 = vpack.c.b16 %v921, %v913
    %v1290 = vpack.c.b16 %v922, %v914
    %v1291 = vpack.c.b16 %v923, %v915
    %v1292 = vpack.c.b16 %v932, %v924
    %v1293 = vpack.c.b16 %v933, %v925
    %v1294 = vpack.c.b16 %v934, %v926
    %v1295 = vpack.c.b16 %v935, %v927
    %v1296 = vpack.c.b16 %v936, %v928
    %v1297 = vpack.c.b16 %v937, %v929
    %v1298 = vpack.c.b16 %v938, %v930
    %v1299 = vpack.c.b16 %v939, %v931
    %v1300 = vpack.c.b16 %v948, %v940
    %v1301 = vpack.c.b16 %v949, %v941
    %v1302 = vpack.c.b16 %v950, %v942
    %v1303 = vpack.c.b16 %v951, %v943
    %v1304 = vpack.c.b16 %v952, %v944
    %v1305 = vpack.c.b16 %v953, %v945
    %v1306 = vpack.c.b16 %v954, %v946
    %v1307 = vpack.c.b16 %v955, %v947
    %v1308 = vpack.c.b16 %v964, %v956
    %v1309 = vpack.c.b16 %v965, %v957
    %v1310 = vpack.c.b16 %v966, %v958
    %v1311 = vpack.c.b16 %v967, %v959
    %v1312 = vpack.c.b16 %v968, %v960
    %v1313 = vpack.c.b16 %v969, %v961
    %v1314 = vpack.c.b16 %v970, %v962
    %v1315 = vpack.c.b16 %v971, %v963
    %v1316 = vpack.c.b16 %v980, %v972
    %v1317 = vpack.c.b16 %v981, %v973
    %v1318 = vpack.c.b16 %v982, %v974
    %v1319 = vpack.c.b16 %v983, %v975
    %v1320 = vpack.c.b16 %v984, %v976
    %v1321 = vpack.c.b16 %v985, %v977
    %v1322 = vpack.c.b16 %v986, %v978
    %v1323 = vpack.c.b16 %v987, %v979
    %v1324 = vpack.c.b16 %v996, %v988
    %v1325 = vpack.c.b16 %v997, %v989
    %v1326 = vpack.c.b16 %v998, %v990
    %v1327 = vpack.c.b16 %v999, %v991
    %v1328 = vpack.c.b16 %v1000, %v992
    %v1329 = vpack.c.b16 %v1001, %v993
    %v1330 = vpack.c.b16 %v1002, %v994
    %v1331 = vpack.c.b16 %v1003, %v995
    %v1332 = vpack.c.b16 %v1012, %v1004
    %v1333 = vpack.c.b16 %v1013, %v1005
    %v1334 = vpack.c.b16 %v1014, %v1006
    %v1335 = vpack.c.b16 %v1015, %v1007
    %v1336 = vpack.c.b16 %v1016, %v1008
    %v1337 = vpack.c.b16 %v1017, %v1009
    %v1338 = vpack.c.b16 %v1018, %v1010
    %v1339 = vpack.c.b16 %v1019, %v1011
    %v1340 = vpack.c.b16 %v1028, %v1020
    %v1341 = vpack.c.b16 %v1029, %v1021
    %v1342 = vpack.c.b16 %v1030, %v1022
    %v1343 = vpack.c.b16 %v1031, %v1023
    %v1344 = vpack.c.b16 %v1032, %v1024
    %v1345 = vpack.c.b16 %v1033, %v1025
    %v1346 = vpack.c.b16 %v1034, %v1026
    %v1347 = vpack.c.b16 %v1035, %v1027
    %v1348 = vpack.c.b16 %v1044, %v1036
    %v1349 = vpack.c.b16 %v1045, %v1037
    %v1350 = vpack.c.b16 %v1046, %v1038
    %v1351 = vpack.c.b16 %v1047, %v1039
    %v1352 = vpack.c.b16 %v1048, %v1040
    %v1353 = vpack.c.b16 %v1049, %v1041
    %v1354 = vpack.c.b16 %v1050, %v1042
    %v1355 = vpack.c.b16 %v1051, %v1043
    %v1356 = vpack.c.b16 %v1060, %v1052
    %v1357 = vpack.c.b16 %v1061, %v1053
    %v1358 = vpack.c.b16 %v1062, %v1054
    %v1359 = vpack.c.b16 %v1063, %v1055
    %v1360 = vpack.c.b16 %v1064, %v1056
    %v1361 = vpack.c.b16 %v1065, %v1057
    %v1362 = vpack.c.b16 %v1066, %v1058
    %v1363 = vpack.c.b16 %v1067, %v1059
    %v1364 = vpack.c.b16 %v1076, %v1068
    %v1365 = vpack.c.b16 %v1077, %v1069
    %v1366 = vpack.c.b16 %v1078, %v1070
    %v1367 = vpack.c.b16 %v1079, %v1071
    %v1368 = vpack.c.b16 %v1080, %v1072
    %v1369 = vpack.c.b16 %v1081, %v1073
    %v1370 = vpack.c.b16 %v1082, %v1074
    %v1371 = vpack.c.b16 %v1083, %v1075
    %v1372 = vpack.c.b16 %v1092, %v1084
    %v1373 = vpack.c.b16 %v1093, %v1085
    %v1374 = vpack.c.b16 %v1094, %v1086
    %v1375 = vpack.c.b16 %v1095, %v1087
    %v1376 = vpack.c.b16 %v1096, %v1088
    %v1377 = vpack.c.b16 %v1097, %v1089
    %v1378 = vpack.c.b16 %v1098, %v1090
    %v1379 = vpack.c.b16 %v1099, %v1091
    %v1380 = vpack.c.b16 %v1108, %v1100
    %v1381 = vpack.c.b16 %v1109, %v1101
    %v1382 = vpack.c.b16 %v1110, %v1102
    %v1383 = vpack.c.b16 %v1111, %v1103
    %v1384 = vpack.c.b16 %v1112, %v1104
    %v1385 = vpack.c.b16 %v1113, %v1105
    %v1386 = vpack.c.b16 %v1114, %v1106
    %v1387 = vpack.c.b16 %v1115, %v1107
    %v1388 = vpack.c.b16 %v1124, %v1116
    %v1389 = vpack.c.b16 %v1125, %v1117
    %v1390 = vpack.c.b16 %v1126, %v1118
    %v1391 = vpack.c.b16 %v1127, %v1119
    %v1392 = vpack.c.b16 %v1128, %v1120
    %v1393 = vpack.c.b16 %v1129, %v1121
    %v1394 = vpack.c.b16 %v1130, %v1122
    %v1395 = vpack.c.b16 %v1131, %v1123
    %v1396 = vpack.c.b16 %v1140, %v1132
    %v1397 = vpack.c.b16 %v1141, %v1133
    %v1398 = vpack.c.b16 %v1142, %v1134
    %v1399 = vpack.c.b16 %v1143, %v1135
    %v1400 = vpack.c.b16 %v1144, %v1136
    %v1401 = vpack.c.b16 %v1145, %v1137
    %v1402 = vpack.c.b16 %v1146, %v1138
    %v1403 = vpack.c.b16 %v1147, %v1139
    %1660 = vmatpush.bf16.msra.mxu0 %v1204
    %1661 = vmatpush.bf16.msra.mxu0 %v1196
    %1662 = vmatpush.bf16.msra.mxu0 %v1188
    %1663 = vmatpush.bf16.msra.mxu0 %v1180
    %1664 = vmatpush.bf16.msra.mxu0 %v1172
    %1665 = vmatpush.bf16.msra.mxu0 %v1164
    %1666 = vmatpush.bf16.msra.mxu0 %v1156
    %1667 = vmatpush.bf16.msra.mxu0 %v1148
    %1668 = vmatmul.bf16.gmra.mxu0 %v372
    %v1669 = vpop.f32.mrf.mxu0
    %v1670 = vadd.f32 %v344, %v1669
    %v1671 = vpop.f32.mrf.mxu0
    %v1672 = vadd.f32 %v344, %v1671
    %1673 = vdwg.mxu0
    %1674 = vmatpush.bf16.msra.mxu0 %v1268
    %1675 = vmatpush.bf16.msra.mxu0 %v1260
    %1676 = vmatpush.bf16.msra.mxu0 %v1252
    %1677 = vmatpush.bf16.msra.mxu0 %v1244
    %1678 = vmatpush.bf16.msra.mxu0 %v1236
    %1679 = vmatpush.bf16.msra.mxu0 %v1228
    %1680 = vmatpush.bf16.msra.mxu0 %v1220
    %1681 = vmatpush.bf16.msra.mxu0 %v1212
    %1682 = vmatmul.bf16.gmra.mxu0 %v373
    %v1683 = vpop.f32.mrf.mxu0
    %v1684 = vadd.f32 %v1670, %v1683
    %v1685 = vpop.f32.mrf.mxu0
    %v1686 = vadd.f32 %v1672, %v1685
    %1687 = vdwg.mxu0
    %1688 = vmatpush.bf16.msra.mxu0 %v1332
    %1689 = vmatpush.bf16.msra.mxu0 %v1324
    %1690 = vmatpush.bf16.msra.mxu0 %v1316
    %1691 = vmatpush.bf16.msra.mxu0 %v1308
    %1692 = vmatpush.bf16.msra.mxu0 %v1300
    %1693 = vmatpush.bf16.msra.mxu0 %v1292
    %1694 = vmatpush.bf16.msra.mxu0 %v1284
    %1695 = vmatpush.bf16.msra.mxu0 %v1276
    %1696 = vmatmul.bf16.gmra.mxu0 %v374
    %v1697 = vpop.f32.mrf.mxu0
    %v1698 = vadd.f32 %v1684, %v1697
    %v1699 = vpop.f32.mrf.mxu0
    %v1700 = vadd.f32 %v1686, %v1699
    %1701 = vdwg.mxu0
    %1702 = vmatpush.bf16.msra.mxu0 %v1396
    %1703 = vmatpush.bf16.msra.mxu0 %v1388
    %1704 = vmatpush.bf16.msra.mxu0 %v1380
    %1705 = vmatpush.bf16.msra.mxu0 %v1372
    %1706 = vmatpush.bf16.msra.mxu0 %v1364
    %1707 = vmatpush.bf16.msra.mxu0 %v1356
    %1708 = vmatpush.bf16.msra.mxu0 %v1348
    %1709 = vmatpush.bf16.msra.mxu0 %v1340
    %1710 = vmatmul.bf16.gmra.mxu0 %v375
    %v1711 = vpop.f32.mrf.mxu0
    %v1712 = vadd.f32 %v1698, %v1711
    %v1713 = vpop.f32.mrf.mxu0
    %v1714 = vadd.f32 %v1700, %v1713
    %1715 = vdwg.mxu0
    %1716 = vmatpush.bf16.msra.mxu0 %v1205
    %1717 = vmatpush.bf16.msra.mxu0 %v1197
    %1718 = vmatpush.bf16.msra.mxu0 %v1189
    %1719 = vmatpush.bf16.msra.mxu0 %v1181
    %1720 = vmatpush.bf16.msra.mxu0 %v1173
    %1721 = vmatpush.bf16.msra.mxu0 %v1165
    %1722 = vmatpush.bf16.msra.mxu0 %v1157
    %1723 = vmatpush.bf16.msra.mxu0 %v1149
    %1724 = vmatmul.bf16.gmra.mxu0 %v372
    %v1725 = vpop.f32.mrf.mxu0
    %v1726 = vadd.f32 %v345, %v1725
    %v1727 = vpop.f32.mrf.mxu0
    %v1728 = vadd.f32 %v345, %v1727
    %1729 = vdwg.mxu0
    %1730 = vmatpush.bf16.msra.mxu0 %v1269
    %1731 = vmatpush.bf16.msra.mxu0 %v1261
    %1732 = vmatpush.bf16.msra.mxu0 %v1253
    %1733 = vmatpush.bf16.msra.mxu0 %v1245
    %1734 = vmatpush.bf16.msra.mxu0 %v1237
    %1735 = vmatpush.bf16.msra.mxu0 %v1229
    %1736 = vmatpush.bf16.msra.mxu0 %v1221
    %1737 = vmatpush.bf16.msra.mxu0 %v1213
    %1738 = vmatmul.bf16.gmra.mxu0 %v373
    %v1739 = vpop.f32.mrf.mxu0
    %v1740 = vadd.f32 %v1726, %v1739
    %v1741 = vpop.f32.mrf.mxu0
    %v1742 = vadd.f32 %v1728, %v1741
    %1743 = vdwg.mxu0
    %1744 = vmatpush.bf16.msra.mxu0 %v1333
    %1745 = vmatpush.bf16.msra.mxu0 %v1325
    %1746 = vmatpush.bf16.msra.mxu0 %v1317
    %1747 = vmatpush.bf16.msra.mxu0 %v1309
    %1748 = vmatpush.bf16.msra.mxu0 %v1301
    %1749 = vmatpush.bf16.msra.mxu0 %v1293
    %1750 = vmatpush.bf16.msra.mxu0 %v1285
    %1751 = vmatpush.bf16.msra.mxu0 %v1277
    %1752 = vmatmul.bf16.gmra.mxu0 %v374
    %v1753 = vpop.f32.mrf.mxu0
    %v1754 = vadd.f32 %v1740, %v1753
    %v1755 = vpop.f32.mrf.mxu0
    %v1756 = vadd.f32 %v1742, %v1755
    %1757 = vdwg.mxu0
    %1758 = vmatpush.bf16.msra.mxu0 %v1397
    %1759 = vmatpush.bf16.msra.mxu0 %v1389
    %1760 = vmatpush.bf16.msra.mxu0 %v1381
    %1761 = vmatpush.bf16.msra.mxu0 %v1373
    %1762 = vmatpush.bf16.msra.mxu0 %v1365
    %1763 = vmatpush.bf16.msra.mxu0 %v1357
    %1764 = vmatpush.bf16.msra.mxu0 %v1349
    %1765 = vmatpush.bf16.msra.mxu0 %v1341
    %1766 = vmatmul.bf16.gmra.mxu0 %v375
    %v1767 = vpop.f32.mrf.mxu0
    %v1768 = vadd.f32 %v1754, %v1767
    %v1769 = vpop.f32.mrf.mxu0
    %v1770 = vadd.f32 %v1756, %v1769
    %1771 = vdwg.mxu0
    %1772 = vmatpush.bf16.msra.mxu0 %v1206
    %1773 = vmatpush.bf16.msra.mxu0 %v1198
    %1774 = vmatpush.bf16.msra.mxu0 %v1190
    %1775 = vmatpush.bf16.msra.mxu0 %v1182
    %1776 = vmatpush.bf16.msra.mxu0 %v1174
    %1777 = vmatpush.bf16.msra.mxu0 %v1166
    %1778 = vmatpush.bf16.msra.mxu0 %v1158
    %1779 = vmatpush.bf16.msra.mxu0 %v1150
    %1780 = vmatmul.bf16.gmra.mxu0 %v372
    %v1781 = vpop.f32.mrf.mxu0
    %v1782 = vadd.f32 %v346, %v1781
    %v1783 = vpop.f32.mrf.mxu0
    %v1784 = vadd.f32 %v346, %v1783
    %1785 = vdwg.mxu0
    %1786 = vmatpush.bf16.msra.mxu0 %v1270
    %1787 = vmatpush.bf16.msra.mxu0 %v1262
    %1788 = vmatpush.bf16.msra.mxu0 %v1254
    %1789 = vmatpush.bf16.msra.mxu0 %v1246
    %1790 = vmatpush.bf16.msra.mxu0 %v1238
    %1791 = vmatpush.bf16.msra.mxu0 %v1230
    %1792 = vmatpush.bf16.msra.mxu0 %v1222
    %1793 = vmatpush.bf16.msra.mxu0 %v1214
    %1794 = vmatmul.bf16.gmra.mxu0 %v373
    %v1795 = vpop.f32.mrf.mxu0
    %v1796 = vadd.f32 %v1782, %v1795
    %v1797 = vpop.f32.mrf.mxu0
    %v1798 = vadd.f32 %v1784, %v1797
    %1799 = vdwg.mxu0
    %1800 = vmatpush.bf16.msra.mxu0 %v1334
    %1801 = vmatpush.bf16.msra.mxu0 %v1326
    %1802 = vmatpush.bf16.msra.mxu0 %v1318
    %1803 = vmatpush.bf16.msra.mxu0 %v1310
    %1804 = vmatpush.bf16.msra.mxu0 %v1302
    %1805 = vmatpush.bf16.msra.mxu0 %v1294
    %1806 = vmatpush.bf16.msra.mxu0 %v1286
    %1807 = vmatpush.bf16.msra.mxu0 %v1278
    %1808 = vmatmul.bf16.gmra.mxu0 %v374
    %v1809 = vpop.f32.mrf.mxu0
    %v1810 = vadd.f32 %v1796, %v1809
    %v1811 = vpop.f32.mrf.mxu0
    %v1812 = vadd.f32 %v1798, %v1811
    %1813 = vdwg.mxu0
    %1814 = vmatpush.bf16.msra.mxu0 %v1398
    %1815 = vmatpush.bf16.msra.mxu0 %v1390
    %1816 = vmatpush.bf16.msra.mxu0 %v1382
    %1817 = vmatpush.bf16.msra.mxu0 %v1374
    %1818 = vmatpush.bf16.msra.mxu0 %v1366
    %1819 = vmatpush.bf16.msra.mxu0 %v1358
    %1820 = vmatpush.bf16.msra.mxu0 %v1350
    %1821 = vmatpush.bf16.msra.mxu0 %v1342
    %1822 = vmatmul.bf16.gmra.mxu0 %v375
    %v1823 = vpop.f32.mrf.mxu0
    %v1824 = vadd.f32 %v1810, %v1823
    %v1825 = vpop.f32.mrf.mxu0
    %v1826 = vadd.f32 %v1812, %v1825
    %1827 = vdwg.mxu0
    %1828 = vmatpush.bf16.msra.mxu0 %v1207
    %1829 = vmatpush.bf16.msra.mxu0 %v1199
    %1830 = vmatpush.bf16.msra.mxu0 %v1191
    %1831 = vmatpush.bf16.msra.mxu0 %v1183
    %1832 = vmatpush.bf16.msra.mxu0 %v1175
    %1833 = vmatpush.bf16.msra.mxu0 %v1167
    %1834 = vmatpush.bf16.msra.mxu0 %v1159
    %1835 = vmatpush.bf16.msra.mxu0 %v1151
    %1836 = vmatmul.bf16.gmra.mxu0 %v372
    %v1837 = vpop.f32.mrf.mxu0
    %v1838 = vadd.f32 %v347, %v1837
    %v1839 = vpop.f32.mrf.mxu0
    %v1840 = vadd.f32 %v347, %v1839
    %1841 = vdwg.mxu0
    %1842 = vmatpush.bf16.msra.mxu0 %v1271
    %1843 = vmatpush.bf16.msra.mxu0 %v1263
    %1844 = vmatpush.bf16.msra.mxu0 %v1255
    %1845 = vmatpush.bf16.msra.mxu0 %v1247
    %1846 = vmatpush.bf16.msra.mxu0 %v1239
    %1847 = vmatpush.bf16.msra.mxu0 %v1231
    %1848 = vmatpush.bf16.msra.mxu0 %v1223
    %1849 = vmatpush.bf16.msra.mxu0 %v1215
    %1850 = vmatmul.bf16.gmra.mxu0 %v373
    %v1851 = vpop.f32.mrf.mxu0
    %v1852 = vadd.f32 %v1838, %v1851
    %v1853 = vpop.f32.mrf.mxu0
    %v1854 = vadd.f32 %v1840, %v1853
    %1855 = vdwg.mxu0
    %1856 = vmatpush.bf16.msra.mxu0 %v1335
    %1857 = vmatpush.bf16.msra.mxu0 %v1327
    %1858 = vmatpush.bf16.msra.mxu0 %v1319
    %1859 = vmatpush.bf16.msra.mxu0 %v1311
    %1860 = vmatpush.bf16.msra.mxu0 %v1303
    %1861 = vmatpush.bf16.msra.mxu0 %v1295
    %1862 = vmatpush.bf16.msra.mxu0 %v1287
    %1863 = vmatpush.bf16.msra.mxu0 %v1279
    %1864 = vmatmul.bf16.gmra.mxu0 %v374
    %v1865 = vpop.f32.mrf.mxu0
    %v1866 = vadd.f32 %v1852, %v1865
    %v1867 = vpop.f32.mrf.mxu0
    %v1868 = vadd.f32 %v1854, %v1867
    %1869 = vdwg.mxu0
    %1870 = vmatpush.bf16.msra.mxu0 %v1399
    %1871 = vmatpush.bf16.msra.mxu0 %v1391
    %1872 = vmatpush.bf16.msra.mxu0 %v1383
    %1873 = vmatpush.bf16.msra.mxu0 %v1375
    %1874 = vmatpush.bf16.msra.mxu0 %v1367
    %1875 = vmatpush.bf16.msra.mxu0 %v1359
    %1876 = vmatpush.bf16.msra.mxu0 %v1351
    %1877 = vmatpush.bf16.msra.mxu0 %v1343
    %1878 = vmatmul.bf16.gmra.mxu0 %v375
    %v1879 = vpop.f32.mrf.mxu0
    %v1880 = vadd.f32 %v1866, %v1879
    %v1881 = vpop.f32.mrf.mxu0
    %v1882 = vadd.f32 %v1868, %v1881
    %1883 = vdwg.mxu0
    %1884 = vmatpush.bf16.msra.mxu0 %v1208
    %1885 = vmatpush.bf16.msra.mxu0 %v1200
    %1886 = vmatpush.bf16.msra.mxu0 %v1192
    %1887 = vmatpush.bf16.msra.mxu0 %v1184
    %1888 = vmatpush.bf16.msra.mxu0 %v1176
    %1889 = vmatpush.bf16.msra.mxu0 %v1168
    %1890 = vmatpush.bf16.msra.mxu0 %v1160
    %1891 = vmatpush.bf16.msra.mxu0 %v1152
    %1892 = vmatmul.bf16.gmra.mxu0 %v372
    %v1893 = vpop.f32.mrf.mxu0
    %v1894 = vadd.f32 %v348, %v1893
    %v1895 = vpop.f32.mrf.mxu0
    %v1896 = vadd.f32 %v348, %v1895
    %1897 = vdwg.mxu0
    %1898 = vmatpush.bf16.msra.mxu0 %v1272
    %1899 = vmatpush.bf16.msra.mxu0 %v1264
    %1900 = vmatpush.bf16.msra.mxu0 %v1256
    %1901 = vmatpush.bf16.msra.mxu0 %v1248
    %1902 = vmatpush.bf16.msra.mxu0 %v1240
    %1903 = vmatpush.bf16.msra.mxu0 %v1232
    %1904 = vmatpush.bf16.msra.mxu0 %v1224
    %1905 = vmatpush.bf16.msra.mxu0 %v1216
    %1906 = vmatmul.bf16.gmra.mxu0 %v373
    %v1907 = vpop.f32.mrf.mxu0
    %v1908 = vadd.f32 %v1894, %v1907
    %v1909 = vpop.f32.mrf.mxu0
    %v1910 = vadd.f32 %v1896, %v1909
    %1911 = vdwg.mxu0
    %1912 = vmatpush.bf16.msra.mxu0 %v1336
    %1913 = vmatpush.bf16.msra.mxu0 %v1328
    %1914 = vmatpush.bf16.msra.mxu0 %v1320
    %1915 = vmatpush.bf16.msra.mxu0 %v1312
    %1916 = vmatpush.bf16.msra.mxu0 %v1304
    %1917 = vmatpush.bf16.msra.mxu0 %v1296
    %1918 = vmatpush.bf16.msra.mxu0 %v1288
    %1919 = vmatpush.bf16.msra.mxu0 %v1280
    %1920 = vmatmul.bf16.gmra.mxu0 %v374
    %v1921 = vpop.f32.mrf.mxu0
    %v1922 = vadd.f32 %v1908, %v1921
    %v1923 = vpop.f32.mrf.mxu0
    %v1924 = vadd.f32 %v1910, %v1923
    %1925 = vdwg.mxu0
    %1926 = vmatpush.bf16.msra.mxu0 %v1400
    %1927 = vmatpush.bf16.msra.mxu0 %v1392
    %1928 = vmatpush.bf16.msra.mxu0 %v1384
    %1929 = vmatpush.bf16.msra.mxu0 %v1376
    %1930 = vmatpush.bf16.msra.mxu0 %v1368
    %1931 = vmatpush.bf16.msra.mxu0 %v1360
    %1932 = vmatpush.bf16.msra.mxu0 %v1352
    %1933 = vmatpush.bf16.msra.mxu0 %v1344
    %1934 = vmatmul.bf16.gmra.mxu0 %v375
    %v1935 = vpop.f32.mrf.mxu0
    %v1936 = vadd.f32 %v1922, %v1935
    %v1937 = vpop.f32.mrf.mxu0
    %v1938 = vadd.f32 %v1924, %v1937
    %1939 = vdwg.mxu0
    %1940 = vmatpush.bf16.msra.mxu0 %v1209
    %1941 = vmatpush.bf16.msra.mxu0 %v1201
    %1942 = vmatpush.bf16.msra.mxu0 %v1193
    %1943 = vmatpush.bf16.msra.mxu0 %v1185
    %1944 = vmatpush.bf16.msra.mxu0 %v1177
    %1945 = vmatpush.bf16.msra.mxu0 %v1169
    %1946 = vmatpush.bf16.msra.mxu0 %v1161
    %1947 = vmatpush.bf16.msra.mxu0 %v1153
    %1948 = vmatmul.bf16.gmra.mxu0 %v372
    %v1949 = vpop.f32.mrf.mxu0
    %v1950 = vadd.f32 %v349, %v1949
    %v1951 = vpop.f32.mrf.mxu0
    %v1952 = vadd.f32 %v349, %v1951
    %1953 = vdwg.mxu0
    %1954 = vmatpush.bf16.msra.mxu0 %v1273
    %1955 = vmatpush.bf16.msra.mxu0 %v1265
    %1956 = vmatpush.bf16.msra.mxu0 %v1257
    %1957 = vmatpush.bf16.msra.mxu0 %v1249
    %1958 = vmatpush.bf16.msra.mxu0 %v1241
    %1959 = vmatpush.bf16.msra.mxu0 %v1233
    %1960 = vmatpush.bf16.msra.mxu0 %v1225
    %1961 = vmatpush.bf16.msra.mxu0 %v1217
    %1962 = vmatmul.bf16.gmra.mxu0 %v373
    %v1963 = vpop.f32.mrf.mxu0
    %v1964 = vadd.f32 %v1950, %v1963
    %v1965 = vpop.f32.mrf.mxu0
    %v1966 = vadd.f32 %v1952, %v1965
    %1967 = vdwg.mxu0
    %1968 = vmatpush.bf16.msra.mxu0 %v1337
    %1969 = vmatpush.bf16.msra.mxu0 %v1329
    %1970 = vmatpush.bf16.msra.mxu0 %v1321
    %1971 = vmatpush.bf16.msra.mxu0 %v1313
    %1972 = vmatpush.bf16.msra.mxu0 %v1305
    %1973 = vmatpush.bf16.msra.mxu0 %v1297
    %1974 = vmatpush.bf16.msra.mxu0 %v1289
    %1975 = vmatpush.bf16.msra.mxu0 %v1281
    %1976 = vmatmul.bf16.gmra.mxu0 %v374
    %v1977 = vpop.f32.mrf.mxu0
    %v1978 = vadd.f32 %v1964, %v1977
    %v1979 = vpop.f32.mrf.mxu0
    %v1980 = vadd.f32 %v1966, %v1979
    %1981 = vdwg.mxu0
    %1982 = vmatpush.bf16.msra.mxu0 %v1401
    %1983 = vmatpush.bf16.msra.mxu0 %v1393
    %1984 = vmatpush.bf16.msra.mxu0 %v1385
    %1985 = vmatpush.bf16.msra.mxu0 %v1377
    %1986 = vmatpush.bf16.msra.mxu0 %v1369
    %1987 = vmatpush.bf16.msra.mxu0 %v1361
    %1988 = vmatpush.bf16.msra.mxu0 %v1353
    %1989 = vmatpush.bf16.msra.mxu0 %v1345
    %1990 = vmatmul.bf16.gmra.mxu0 %v375
    %v1991 = vpop.f32.mrf.mxu0
    %v1992 = vadd.f32 %v1978, %v1991
    %v1993 = vpop.f32.mrf.mxu0
    %v1994 = vadd.f32 %v1980, %v1993
    %1995 = vdwg.mxu0
    %1996 = vmatpush.bf16.msra.mxu0 %v1210
    %1997 = vmatpush.bf16.msra.mxu0 %v1202
    %1998 = vmatpush.bf16.msra.mxu0 %v1194
    %1999 = vmatpush.bf16.msra.mxu0 %v1186
    %2000 = vmatpush.bf16.msra.mxu0 %v1178
    %2001 = vmatpush.bf16.msra.mxu0 %v1170
    %2002 = vmatpush.bf16.msra.mxu0 %v1162
    %2003 = vmatpush.bf16.msra.mxu0 %v1154
    %2004 = vmatmul.bf16.gmra.mxu0 %v372
    %v2005 = vpop.f32.mrf.mxu0
    %v2006 = vadd.f32 %v350, %v2005
    %v2007 = vpop.f32.mrf.mxu0
    %v2008 = vadd.f32 %v350, %v2007
    %2009 = vdwg.mxu0
    %2010 = vmatpush.bf16.msra.mxu0 %v1274
    %2011 = vmatpush.bf16.msra.mxu0 %v1266
    %2012 = vmatpush.bf16.msra.mxu0 %v1258
    %2013 = vmatpush.bf16.msra.mxu0 %v1250
    %2014 = vmatpush.bf16.msra.mxu0 %v1242
    %2015 = vmatpush.bf16.msra.mxu0 %v1234
    %2016 = vmatpush.bf16.msra.mxu0 %v1226
    %2017 = vmatpush.bf16.msra.mxu0 %v1218
    %2018 = vmatmul.bf16.gmra.mxu0 %v373
    %v2019 = vpop.f32.mrf.mxu0
    %v2020 = vadd.f32 %v2006, %v2019
    %v2021 = vpop.f32.mrf.mxu0
    %v2022 = vadd.f32 %v2008, %v2021
    %2023 = vdwg.mxu0
    %2024 = vmatpush.bf16.msra.mxu0 %v1338
    %2025 = vmatpush.bf16.msra.mxu0 %v1330
    %2026 = vmatpush.bf16.msra.mxu0 %v1322
    %2027 = vmatpush.bf16.msra.mxu0 %v1314
    %2028 = vmatpush.bf16.msra.mxu0 %v1306
    %2029 = vmatpush.bf16.msra.mxu0 %v1298
    %2030 = vmatpush.bf16.msra.mxu0 %v1290
    %2031 = vmatpush.bf16.msra.mxu0 %v1282
    %2032 = vmatmul.bf16.gmra.mxu0 %v374
    %v2033 = vpop.f32.mrf.mxu0
    %v2034 = vadd.f32 %v2020, %v2033
    %v2035 = vpop.f32.mrf.mxu0
    %v2036 = vadd.f32 %v2022, %v2035
    %2037 = vdwg.mxu0
    %2038 = vmatpush.bf16.msra.mxu0 %v1402
    %2039 = vmatpush.bf16.msra.mxu0 %v1394
    %2040 = vmatpush.bf16.msra.mxu0 %v1386
    %2041 = vmatpush.bf16.msra.mxu0 %v1378
    %2042 = vmatpush.bf16.msra.mxu0 %v1370
    %2043 = vmatpush.bf16.msra.mxu0 %v1362
    %2044 = vmatpush.bf16.msra.mxu0 %v1354
    %2045 = vmatpush.bf16.msra.mxu0 %v1346
    %2046 = vmatmul.bf16.gmra.mxu0 %v375
    %v2047 = vpop.f32.mrf.mxu0
    %v2048 = vadd.f32 %v2034, %v2047
    %v2049 = vpop.f32.mrf.mxu0
    %v2050 = vadd.f32 %v2036, %v2049
    %2051 = vdwg.mxu0
    %2052 = vmatpush.bf16.msra.mxu0 %v1211
    %2053 = vmatpush.bf16.msra.mxu0 %v1203
    %2054 = vmatpush.bf16.msra.mxu0 %v1195
    %2055 = vmatpush.bf16.msra.mxu0 %v1187
    %2056 = vmatpush.bf16.msra.mxu0 %v1179
    %2057 = vmatpush.bf16.msra.mxu0 %v1171
    %2058 = vmatpush.bf16.msra.mxu0 %v1163
    %2059 = vmatpush.bf16.msra.mxu0 %v1155
    %2060 = vmatmul.bf16.gmra.mxu0 %v372
    %v2061 = vpop.f32.mrf.mxu0
    %v2062 = vadd.f32 %v351, %v2061
    %v2063 = vpop.f32.mrf.mxu0
    %v2064 = vadd.f32 %v351, %v2063
    %2065 = vdwg.mxu0
    %2066 = vmatpush.bf16.msra.mxu0 %v1275
    %2067 = vmatpush.bf16.msra.mxu0 %v1267
    %2068 = vmatpush.bf16.msra.mxu0 %v1259
    %2069 = vmatpush.bf16.msra.mxu0 %v1251
    %2070 = vmatpush.bf16.msra.mxu0 %v1243
    %2071 = vmatpush.bf16.msra.mxu0 %v1235
    %2072 = vmatpush.bf16.msra.mxu0 %v1227
    %2073 = vmatpush.bf16.msra.mxu0 %v1219
    %2074 = vmatmul.bf16.gmra.mxu0 %v373
    %v2075 = vpop.f32.mrf.mxu0
    %v2076 = vadd.f32 %v2062, %v2075
    %v2077 = vpop.f32.mrf.mxu0
    %v2078 = vadd.f32 %v2064, %v2077
    %2079 = vdwg.mxu0
    %2080 = vmatpush.bf16.msra.mxu0 %v1339
    %2081 = vmatpush.bf16.msra.mxu0 %v1331
    %2082 = vmatpush.bf16.msra.mxu0 %v1323
    %2083 = vmatpush.bf16.msra.mxu0 %v1315
    %2084 = vmatpush.bf16.msra.mxu0 %v1307
    %2085 = vmatpush.bf16.msra.mxu0 %v1299
    %2086 = vmatpush.bf16.msra.mxu0 %v1291
    %2087 = vmatpush.bf16.msra.mxu0 %v1283
    %2088 = vmatmul.bf16.gmra.mxu0 %v374
    %v2089 = vpop.f32.mrf.mxu0
    %v2090 = vadd.f32 %v2076, %v2089
    %v2091 = vpop.f32.mrf.mxu0
    %v2092 = vadd.f32 %v2078, %v2091
    %2093 = vdwg.mxu0
    %2094 = vmatpush.bf16.msra.mxu0 %v1403
    %2095 = vmatpush.bf16.msra.mxu0 %v1395
    %2096 = vmatpush.bf16.msra.mxu0 %v1387
    %2097 = vmatpush.bf16.msra.mxu0 %v1379
    %2098 = vmatpush.bf16.msra.mxu0 %v1371
    %2099 = vmatpush.bf16.msra.mxu0 %v1363
    %2100 = vmatpush.bf16.msra.mxu0 %v1355
    %2101 = vmatpush.bf16.msra.mxu0 %v1347
    %2102 = vmatmul.bf16.gmra.mxu0 %v375
    %v2103 = vpop.f32.mrf.mxu0
    %v2104 = vadd.f32 %v2090, %v2103
    %v2105 = vpop.f32.mrf.mxu0
    %v2106 = vadd.f32 %v2092, %v2105
    %2107 = vdwg.mxu0
    %v2108 = vmul.f32 %v1712, %v1712
    %v2109 = vmul.f32 %v1768, %v1768
    %v2110 = vmul.f32 %v1824, %v1824
    %v2111 = vmul.f32 %v1880, %v1880
    %v2112 = vmul.f32 %v1936, %v1936
    %v2113 = vmul.f32 %v1992, %v1992
    %v2114 = vmul.f32 %v2048, %v2048
    %v2115 = vmul.f32 %v2104, %v2104
    %v2116 = vmul.f32 %v1714, %v1714
    %v2117 = vmul.f32 %v1770, %v1770
    %v2118 = vmul.f32 %v1826, %v1826
    %v2119 = vmul.f32 %v1882, %v1882
    %v2120 = vmul.f32 %v1938, %v1938
    %v2121 = vmul.f32 %v1994, %v1994
    %v2122 = vmul.f32 %v2050, %v2050
    %v2123 = vmul.f32 %v2106, %v2106
    %v2124 = vadd.f32 %v2108, %v2109
    %v2125 = vadd.f32 %v2124, %v2110
    %v2126 = vadd.f32 %v2125, %v2111
    %v2127 = vadd.f32 %v2126, %v2112
    %v2128 = vadd.f32 %v2127, %v2113
    %v2129 = vadd.f32 %v2128, %v2114
    %v2130 = vadd.f32 %v2129, %v2115
    %2131 = vadd.xlane.f32.xlu0 %v2130
    %v2132 = vpop.xlane.xlu0 %2131
    %v2133 = vadd.f32 %v2116, %v2117
    %v2134 = vadd.f32 %v2133, %v2118
    %v2135 = vadd.f32 %v2134, %v2119
    %v2136 = vadd.f32 %v2135, %v2120
    %v2137 = vadd.f32 %v2136, %v2121
    %v2138 = vadd.f32 %v2137, %v2122
    %v2139 = vadd.f32 %v2138, %v2123
    %2140 = vadd.xlane.f32.xlu0 %v2139
    %v2141 = vpop.xlane.xlu0 %2140
    %v2142 = vmax.f32 %v2132, 1e-24
    %v2143 = vmax.f32 %v2141, 1e-24
    %v2144 = vrsqrt.pop %v2142
    %v2145 = vmul.f32 %v2144, %v2142
    %v2146 = vmul.f32 %v2145, %v2144
    %v2147 = vmul.f32 0.5, %v2146
    %v2148 = vsub.f32 1.5, %v2147
    %v2149 = vmul.f32 %v2144, %v2148
    %vm2150 = vweird.f32 %v2142
    %vm2151 = vweird.f32 %v2144
    %vm2152 = vmor %vm2150, %vm2151
    %v2153 = vsel %vm2152, %v2144, %v2149
    %v2154 = vrsqrt.pop %v2143
    %v2155 = vmul.f32 %v2154, %v2143
    %v2156 = vmul.f32 %v2155, %v2154
    %v2157 = vmul.f32 0.5, %v2156
    %v2158 = vsub.f32 1.5, %v2157
    %v2159 = vmul.f32 %v2154, %v2158
    %vm2160 = vweird.f32 %v2143
    %vm2161 = vweird.f32 %v2154
    %vm2162 = vmor %vm2160, %vm2161
    %v2163 = vsel %vm2162, %v2154, %v2159
    %v2164 = vmul.f32 %v1712, %v2153
    %v2165 = vmul.f32 %v1768, %v2153
    %v2166 = vmul.f32 %v1824, %v2153
    %v2167 = vmul.f32 %v1880, %v2153
    %v2168 = vmul.f32 %v1936, %v2153
    %v2169 = vmul.f32 %v1992, %v2153
    %v2170 = vmul.f32 %v2048, %v2153
    %v2171 = vmul.f32 %v2104, %v2153
    %v2172 = vmul.f32 %v1714, %v2163
    %v2173 = vmul.f32 %v1770, %v2163
    %v2174 = vmul.f32 %v1826, %v2163
    %v2175 = vmul.f32 %v1882, %v2163
    %v2176 = vmul.f32 %v1938, %v2163
    %v2177 = vmul.f32 %v1994, %v2163
    %v2178 = vmul.f32 %v2050, %v2163
    %v2179 = vmul.f32 %v2106, %v2163
    %v2180 = vmax.f32 %v2164, 1e-06
    %v2181 = vmax.f32 %v2165, 1e-06
    %v2182 = vmax.f32 %v2166, 1e-06
    %v2183 = vmax.f32 %v2167, 1e-06
    %v2184 = vmax.f32 %v2168, 1e-06
    %v2185 = vmax.f32 %v2169, 1e-06
    %v2186 = vmax.f32 %v2170, 1e-06
    %v2187 = vmax.f32 %v2171, 1e-06
    %v2188 = vmax.f32 %v2172, 1e-06
    %v2189 = vmax.f32 %v2173, 1e-06
    %v2190 = vmax.f32 %v2174, 1e-06
    %v2191 = vmax.f32 %v2175, 1e-06
    %v2192 = vmax.f32 %v2176, 1e-06
    %v2193 = vmax.f32 %v2177, 1e-06
    %v2194 = vmax.f32 %v2178, 1e-06
    %v2195 = vmax.f32 %v2179, 1e-06
    %v2196 = vpack.c.bf16 %v2188, %v2180
    %v2197 = vpack.c.bf16 %v2189, %v2181
    %v2198 = vpack.c.bf16 %v2190, %v2182
    %v2199 = vpack.c.bf16 %v2191, %v2183
    %v2200 = vpack.c.bf16 %v2192, %v2184
    %v2201 = vpack.c.bf16 %v2193, %v2185
    %v2202 = vpack.c.bf16 %v2194, %v2186
    %v2203 = vpack.c.bf16 %v2195, %v2187
    %v2204 = vld [vmem:[#allocation8] sm:$0xf]
    %v2205 = vld [vmem:[#allocation8 + $0x4] sm:$0xf]
    %v2206 = vld [vmem:[#allocation8 + $0x8] sm:$0xf]
    %v2207 = vld [vmem:[#allocation8 + $0xc] sm:$0xf]
    %v2208 = vld [vmem:[#allocation8 + $0x10] sm:$0xf]
    %v2209 = vld [vmem:[#allocation8 + $0x14] sm:$0xf]
    %v2210 = vld [vmem:[#allocation8 + $0x18] sm:$0xf]
    %v2211 = vld [vmem:[#allocation8 + $0x1c] sm:$0xf]
    %v2212 = vld [vmem:[#allocation8 + $0x20] sm:$0xf]
    %v2213 = vld [vmem:[#allocation8 + $0x24] sm:$0xf]
    %v2214 = vld [vmem:[#allocation8 + $0x28] sm:$0xf]
    %v2215 = vld [vmem:[#allocation8 + $0x2c] sm:$0xf]
    %v2216 = vld [vmem:[#allocation8 + $0x30] sm:$0xf]
    %v2217 = vld [vmem:[#allocation8 + $0x34] sm:$0xf]
    %v2218 = vld [vmem:[#allocation8 + $0x38] sm:$0xf]
    %v2219 = vld [vmem:[#allocation8 + $0x3c] sm:$0xf]
    %v2220 = vld [vmem:[#allocation8 + $0x40] sm:$0xf]
    %v2221 = vld [vmem:[#allocation8 + $0x44] sm:$0xf]
    %v2222 = vld [vmem:[#allocation8 + $0x48] sm:$0xf]
    %v2223 = vld [vmem:[#allocation8 + $0x4c] sm:$0xf]
    %v2224 = vld [vmem:[#allocation8 + $0x50] sm:$0xf]
    %v2225 = vld [vmem:[#allocation8 + $0x54] sm:$0xf]
    %v2226 = vld [vmem:[#allocation8 + $0x58] sm:$0xf]
    %v2227 = vld [vmem:[#allocation8 + $0x5c] sm:$0xf]
    %v2228 = vld [vmem:[#allocation8 + $0x60] sm:$0xf]
    %v2229 = vld [vmem:[#allocation8 + $0x64] sm:$0xf]
    %v2230 = vld [vmem:[#allocation8 + $0x68] sm:$0xf]
    %v2231 = vld [vmem:[#allocation8 + $0x6c] sm:$0xf]
    %v2232 = vld [vmem:[#allocation8 + $0x70] sm:$0xf]
    %v2233 = vld [vmem:[#allocation8 + $0x74] sm:$0xf]
    %v2234 = vld [vmem:[#allocation8 + $0x78] sm:$0xf]
    %v2235 = vld [vmem:[#allocation8 + $0x7c] sm:$0xf]
    %v2236 = vld [vmem:[#allocation8 + $0x80] sm:$0xf]
    %v2237 = vld [vmem:[#allocation8 + $0x84] sm:$0xf]
    %v2238 = vld [vmem:[#allocation8 + $0x88] sm:$0xf]
    %v2239 = vld [vmem:[#allocation8 + $0x8c] sm:$0xf]
    %v2240 = vld [vmem:[#allocation8 + $0x90] sm:$0xf]
    %v2241 = vld [vmem:[#allocation8 + $0x94] sm:$0xf]
    %v2242 = vld [vmem:[#allocation8 + $0x98] sm:$0xf]
    %v2243 = vld [vmem:[#allocation8 + $0x9c] sm:$0xf]
    %v2244 = vld [vmem:[#allocation8 + $0xa0] sm:$0xf]
    %v2245 = vld [vmem:[#allocation8 + $0xa4] sm:$0xf]
    %v2246 = vld [vmem:[#allocation8 + $0xa8] sm:$0xf]
    %v2247 = vld [vmem:[#allocation8 + $0xac] sm:$0xf]
    %v2248 = vld [vmem:[#allocation8 + $0xb0] sm:$0xf]
    %v2249 = vld [vmem:[#allocation8 + $0xb4] sm:$0xf]
    %v2250 = vld [vmem:[#allocation8 + $0xb8] sm:$0xf]
    %v2251 = vld [vmem:[#allocation8 + $0xbc] sm:$0xf]
    %v2252 = vld [vmem:[#allocation8 + $0xc0] sm:$0xf]
    %v2253 = vld [vmem:[#allocation8 + $0xc4] sm:$0xf]
    %v2254 = vld [vmem:[#allocation8 + $0xc8] sm:$0xf]
    %v2255 = vld [vmem:[#allocation8 + $0xcc] sm:$0xf]
    %v2256 = vld [vmem:[#allocation8 + $0xd0] sm:$0xf]
    %v2257 = vld [vmem:[#allocation8 + $0xd4] sm:$0xf]
    %v2258 = vld [vmem:[#allocation8 + $0xd8] sm:$0xf]
    %v2259 = vld [vmem:[#allocation8 + $0xdc] sm:$0xf]
    %v2260 = vld [vmem:[#allocation8 + $0xe0] sm:$0xf]
    %v2261 = vld [vmem:[#allocation8 + $0xe4] sm:$0xf]
    %v2262 = vld [vmem:[#allocation8 + $0xe8] sm:$0xf]
    %v2263 = vld [vmem:[#allocation8 + $0xec] sm:$0xf]
    %v2264 = vld [vmem:[#allocation8 + $0xf0] sm:$0xf]
    %v2265 = vld [vmem:[#allocation8 + $0xf4] sm:$0xf]
    %v2266 = vld [vmem:[#allocation8 + $0xf8] sm:$0xf]
    %v2267 = vld [vmem:[#allocation8 + $0xfc] sm:$0xf]
    %v2268 = vld [vmem:[#allocation8 + $0x100] sm:$0xf]
    %v2269 = vld [vmem:[#allocation8 + $0x104] sm:$0xf]
    %v2270 = vld [vmem:[#allocation8 + $0x108] sm:$0xf]
    %v2271 = vld [vmem:[#allocation8 + $0x10c] sm:$0xf]
    %v2272 = vld [vmem:[#allocation8 + $0x110] sm:$0xf]
    %v2273 = vld [vmem:[#allocation8 + $0x114] sm:$0xf]
    %v2274 = vld [vmem:[#allocation8 + $0x118] sm:$0xf]
    %v2275 = vld [vmem:[#allocation8 + $0x11c] sm:$0xf]
    %v2276 = vld [vmem:[#allocation8 + $0x120] sm:$0xf]
    %v2277 = vld [vmem:[#allocation8 + $0x124] sm:$0xf]
    %v2278 = vld [vmem:[#allocation8 + $0x128] sm:$0xf]
    %v2279 = vld [vmem:[#allocation8 + $0x12c] sm:$0xf]
    %v2280 = vld [vmem:[#allocation8 + $0x130] sm:$0xf]
    %v2281 = vld [vmem:[#allocation8 + $0x134] sm:$0xf]
    %v2282 = vld [vmem:[#allocation8 + $0x138] sm:$0xf]
    %v2283 = vld [vmem:[#allocation8 + $0x13c] sm:$0xf]
    %v2284 = vld [vmem:[#allocation8 + $0x140] sm:$0xf]
    %v2285 = vld [vmem:[#allocation8 + $0x144] sm:$0xf]
    %v2286 = vld [vmem:[#allocation8 + $0x148] sm:$0xf]
    %v2287 = vld [vmem:[#allocation8 + $0x14c] sm:$0xf]
    %v2288 = vld [vmem:[#allocation8 + $0x150] sm:$0xf]
    %v2289 = vld [vmem:[#allocation8 + $0x154] sm:$0xf]
    %v2290 = vld [vmem:[#allocation8 + $0x158] sm:$0xf]
    %v2291 = vld [vmem:[#allocation8 + $0x15c] sm:$0xf]
    %v2292 = vld [vmem:[#allocation8 + $0x160] sm:$0xf]
    %v2293 = vld [vmem:[#allocation8 + $0x164] sm:$0xf]
    %v2294 = vld [vmem:[#allocation8 + $0x168] sm:$0xf]
    %v2295 = vld [vmem:[#allocation8 + $0x16c] sm:$0xf]
    %v2296 = vld [vmem:[#allocation8 + $0x170] sm:$0xf]
    %v2297 = vld [vmem:[#allocation8 + $0x174] sm:$0xf]
    %v2298 = vld [vmem:[#allocation8 + $0x178] sm:$0xf]
    %v2299 = vld [vmem:[#allocation8 + $0x17c] sm:$0xf]
    %v2300 = vld [vmem:[#allocation8 + $0x180] sm:$0xf]
    %v2301 = vld [vmem:[#allocation8 + $0x184] sm:$0xf]
    %v2302 = vld [vmem:[#allocation8 + $0x188] sm:$0xf]
    %v2303 = vld [vmem:[#allocation8 + $0x18c] sm:$0xf]
    %v2304 = vld [vmem:[#allocation8 + $0x190] sm:$0xf]
    %v2305 = vld [vmem:[#allocation8 + $0x194] sm:$0xf]
    %v2306 = vld [vmem:[#allocation8 + $0x198] sm:$0xf]
    %v2307 = vld [vmem:[#allocation8 + $0x19c] sm:$0xf]
    %v2308 = vld [vmem:[#allocation8 + $0x1a0] sm:$0xf]
    %v2309 = vld [vmem:[#allocation8 + $0x1a4] sm:$0xf]
    %v2310 = vld [vmem:[#allocation8 + $0x1a8] sm:$0xf]
    %v2311 = vld [vmem:[#allocation8 + $0x1ac] sm:$0xf]
    %v2312 = vld [vmem:[#allocation8 + $0x1b0] sm:$0xf]
    %v2313 = vld [vmem:[#allocation8 + $0x1b4] sm:$0xf]
    %v2314 = vld [vmem:[#allocation8 + $0x1b8] sm:$0xf]
    %v2315 = vld [vmem:[#allocation8 + $0x1bc] sm:$0xf]
    %v2316 = vld [vmem:[#allocation8 + $0x1c0] sm:$0xf]
    %v2317 = vld [vmem:[#allocation8 + $0x1c4] sm:$0xf]
    %v2318 = vld [vmem:[#allocation8 + $0x1c8] sm:$0xf]
    %v2319 = vld [vmem:[#allocation8 + $0x1cc] sm:$0xf]
    %v2320 = vld [vmem:[#allocation8 + $0x1d0] sm:$0xf]
    %v2321 = vld [vmem:[#allocation8 + $0x1d4] sm:$0xf]
    %v2322 = vld [vmem:[#allocation8 + $0x1d8] sm:$0xf]
    %v2323 = vld [vmem:[#allocation8 + $0x1dc] sm:$0xf]
    %v2324 = vld [vmem:[#allocation8 + $0x1e0] sm:$0xf]
    %v2325 = vld [vmem:[#allocation8 + $0x1e4] sm:$0xf]
    %v2326 = vld [vmem:[#allocation8 + $0x1e8] sm:$0xf]
    %v2327 = vld [vmem:[#allocation8 + $0x1ec] sm:$0xf]
    %v2328 = vld [vmem:[#allocation8 + $0x1f0] sm:$0xf]
    %v2329 = vld [vmem:[#allocation8 + $0x1f4] sm:$0xf]
    %v2330 = vld [vmem:[#allocation8 + $0x1f8] sm:$0xf]
    %v2331 = vld [vmem:[#allocation8 + $0x1fc] sm:$0xf]
    %v2332 = vld [vmem:[%s4] sm:$0x1]
    %v2334 = vperm.slane %v2332, 0
    %v2464 = vunpack.c.l.b16 %v2204
    %v2465 = vunpack.c.l.b16 %v2205
    %v2466 = vunpack.c.l.b16 %v2206
    %v2467 = vunpack.c.l.b16 %v2207
    %v2468 = vunpack.c.l.b16 %v2208
    %v2469 = vunpack.c.l.b16 %v2209
    %v2470 = vunpack.c.l.b16 %v2210
    %v2471 = vunpack.c.l.b16 %v2211
    %v2472 = vunpack.c.l.b16 %v2212
    %v2473 = vunpack.c.l.b16 %v2213
    %v2474 = vunpack.c.l.b16 %v2214
    %v2475 = vunpack.c.l.b16 %v2215
    %v2476 = vunpack.c.l.b16 %v2216
    %v2477 = vunpack.c.l.b16 %v2217
    %v2478 = vunpack.c.l.b16 %v2218
    %v2479 = vunpack.c.l.b16 %v2219
    %v2480 = vunpack.c.l.b16 %v2220
    %v2481 = vunpack.c.l.b16 %v2221
    %v2482 = vunpack.c.l.b16 %v2222
    %v2483 = vunpack.c.l.b16 %v2223
    %v2484 = vunpack.c.l.b16 %v2224
    %v2485 = vunpack.c.l.b16 %v2225
    %v2486 = vunpack.c.l.b16 %v2226
    %v2487 = vunpack.c.l.b16 %v2227
    %v2488 = vunpack.c.l.b16 %v2228
    %v2489 = vunpack.c.l.b16 %v2229
    %v2490 = vunpack.c.l.b16 %v2230
    %v2491 = vunpack.c.l.b16 %v2231
    %v2492 = vunpack.c.l.b16 %v2232
    %v2493 = vunpack.c.l.b16 %v2233
    %v2494 = vunpack.c.l.b16 %v2234
    %v2495 = vunpack.c.l.b16 %v2235
    %v2496 = vunpack.c.l.b16 %v2236
    %v2497 = vunpack.c.l.b16 %v2237
    %v2498 = vunpack.c.l.b16 %v2238
    %v2499 = vunpack.c.l.b16 %v2239
    %v2500 = vunpack.c.l.b16 %v2240
    %v2501 = vunpack.c.l.b16 %v2241
    %v2502 = vunpack.c.l.b16 %v2242
    %v2503 = vunpack.c.l.b16 %v2243
    %v2504 = vunpack.c.l.b16 %v2244
    %v2505 = vunpack.c.l.b16 %v2245
    %v2506 = vunpack.c.l.b16 %v2246
    %v2507 = vunpack.c.l.b16 %v2247
    %v2508 = vunpack.c.l.b16 %v2248
    %v2509 = vunpack.c.l.b16 %v2249
    %v2510 = vunpack.c.l.b16 %v2250
    %v2511 = vunpack.c.l.b16 %v2251
    %v2512 = vunpack.c.l.b16 %v2252
    %v2513 = vunpack.c.l.b16 %v2253
    %v2514 = vunpack.c.l.b16 %v2254
    %v2515 = vunpack.c.l.b16 %v2255
    %v2516 = vunpack.c.l.b16 %v2256
    %v2517 = vunpack.c.l.b16 %v2257
    %v2518 = vunpack.c.l.b16 %v2258
    %v2519 = vunpack.c.l.b16 %v2259
    %v2520 = vunpack.c.l.b16 %v2260
    %v2521 = vunpack.c.l.b16 %v2261
    %v2522 = vunpack.c.l.b16 %v2262
    %v2523 = vunpack.c.l.b16 %v2263
    %v2524 = vunpack.c.l.b16 %v2264
    %v2525 = vunpack.c.l.b16 %v2265
    %v2526 = vunpack.c.l.b16 %v2266
    %v2527 = vunpack.c.l.b16 %v2267
    %v2528 = vunpack.c.l.b16 %v2268
    %v2529 = vunpack.c.l.b16 %v2269
    %v2530 = vunpack.c.l.b16 %v2270
    %v2531 = vunpack.c.l.b16 %v2271
    %v2532 = vunpack.c.l.b16 %v2272
    %v2533 = vunpack.c.l.b16 %v2273
    %v2534 = vunpack.c.l.b16 %v2274
    %v2535 = vunpack.c.l.b16 %v2275
    %v2536 = vunpack.c.l.b16 %v2276
    %v2537 = vunpack.c.l.b16 %v2277
    %v2538 = vunpack.c.l.b16 %v2278
    %v2539 = vunpack.c.l.b16 %v2279
    %v2540 = vunpack.c.l.b16 %v2280
    %v2541 = vunpack.c.l.b16 %v2281
    %v2542 = vunpack.c.l.b16 %v2282
    %v2543 = vunpack.c.l.b16 %v2283
    %v2544 = vunpack.c.l.b16 %v2284
    %v2545 = vunpack.c.l.b16 %v2285
    %v2546 = vunpack.c.l.b16 %v2286
    %v2547 = vunpack.c.l.b16 %v2287
    %v2548 = vunpack.c.l.b16 %v2288
    %v2549 = vunpack.c.l.b16 %v2289
    %v2550 = vunpack.c.l.b16 %v2290
    %v2551 = vunpack.c.l.b16 %v2291
    %v2552 = vunpack.c.l.b16 %v2292
    %v2553 = vunpack.c.l.b16 %v2293
    %v2554 = vunpack.c.l.b16 %v2294
    %v2555 = vunpack.c.l.b16 %v2295
    %v2556 = vunpack.c.l.b16 %v2296
    %v2557 = vunpack.c.l.b16 %v2297
    %v2558 = vunpack.c.l.b16 %v2298
    %v2559 = vunpack.c.l.b16 %v2299
    %v2560 = vunpack.c.l.b16 %v2300
    %v2561 = vunpack.c.l.b16 %v2301
    %v2562 = vunpack.c.l.b16 %v2302
    %v2563 = vunpack.c.l.b16 %v2303
    %v2564 = vunpack.c.l.b16 %v2304
    %v2565 = vunpack.c.l.b16 %v2305
    %v2566 = vunpack.c.l.b16 %v2306
    %v2567 = vunpack.c.l.b16 %v2307
    %v2568 = vunpack.c.l.b16 %v2308
    %v2569 = vunpack.c.l.b16 %v2309
    %v2570 = vunpack.c.l.b16 %v2310
    %v2571 = vunpack.c.l.b16 %v2311
    %v2572 = vunpack.c.l.b16 %v2312
    %v2573 = vunpack.c.l.b16 %v2313
    %v2574 = vunpack.c.l.b16 %v2314
    %v2575 = vunpack.c.l.b16 %v2315
    %v2576 = vunpack.c.l.b16 %v2316
    %v2577 = vunpack.c.l.b16 %v2317
    %v2578 = vunpack.c.l.b16 %v2318
    %v2579 = vunpack.c.l.b16 %v2319
    %v2580 = vunpack.c.l.b16 %v2320
    %v2581 = vunpack.c.l.b16 %v2321
    %v2582 = vunpack.c.l.b16 %v2322
    %v2583 = vunpack.c.l.b16 %v2323
    %v2584 = vunpack.c.l.b16 %v2324
    %v2585 = vunpack.c.l.b16 %v2325
    %v2586 = vunpack.c.l.b16 %v2326
    %v2587 = vunpack.c.l.b16 %v2327
    %v2588 = vunpack.c.l.b16 %v2328
    %v2589 = vunpack.c.l.b16 %v2329
    %v2590 = vunpack.c.l.b16 %v2330
    %v2591 = vunpack.c.l.b16 %v2331
    %v2592 = vpack.c.b16 %v2465, %v2464
    %v2593 = vpack.c.b16 %v2467, %v2466
    %v2594 = vpack.c.b16 %v2469, %v2468
    %v2595 = vpack.c.b16 %v2471, %v2470
    %v2596 = vpack.c.b16 %v2473, %v2472
    %v2597 = vpack.c.b16 %v2475, %v2474
    %v2598 = vpack.c.b16 %v2477, %v2476
    %v2599 = vpack.c.b16 %v2479, %v2478
    %v2600 = vpack.c.b16 %v2481, %v2480
    %v2601 = vpack.c.b16 %v2483, %v2482
    %v2602 = vpack.c.b16 %v2485, %v2484
    %v2603 = vpack.c.b16 %v2487, %v2486
    %v2604 = vpack.c.b16 %v2489, %v2488
    %v2605 = vpack.c.b16 %v2491, %v2490
    %v2606 = vpack.c.b16 %v2493, %v2492
    %v2607 = vpack.c.b16 %v2495, %v2494
    %v2608 = vpack.c.b16 %v2497, %v2496
    %v2609 = vpack.c.b16 %v2499, %v2498
    %v2610 = vpack.c.b16 %v2501, %v2500
    %v2611 = vpack.c.b16 %v2503, %v2502
    %v2612 = vpack.c.b16 %v2505, %v2504
    %v2613 = vpack.c.b16 %v2507, %v2506
    %v2614 = vpack.c.b16 %v2509, %v2508
    %v2615 = vpack.c.b16 %v2511, %v2510
    %v2616 = vpack.c.b16 %v2513, %v2512
    %v2617 = vpack.c.b16 %v2515, %v2514
    %v2618 = vpack.c.b16 %v2517, %v2516
    %v2619 = vpack.c.b16 %v2519, %v2518
    %v2620 = vpack.c.b16 %v2521, %v2520
    %v2621 = vpack.c.b16 %v2523, %v2522
    %v2622 = vpack.c.b16 %v2525, %v2524
    %v2623 = vpack.c.b16 %v2527, %v2526
    %v2624 = vpack.c.b16 %v2529, %v2528
    %v2625 = vpack.c.b16 %v2531, %v2530
    %v2626 = vpack.c.b16 %v2533, %v2532
    %v2627 = vpack.c.b16 %v2535, %v2534
    %v2628 = vpack.c.b16 %v2537, %v2536
    %v2629 = vpack.c.b16 %v2539, %v2538
    %v2630 = vpack.c.b16 %v2541, %v2540
    %v2631 = vpack.c.b16 %v2543, %v2542
    %v2632 = vpack.c.b16 %v2545, %v2544
    %v2633 = vpack.c.b16 %v2547, %v2546
    %v2634 = vpack.c.b16 %v2549, %v2548
    %v2635 = vpack.c.b16 %v2551, %v2550
    %v2636 = vpack.c.b16 %v2553, %v2552
    %v2637 = vpack.c.b16 %v2555, %v2554
    %v2638 = vpack.c.b16 %v2557, %v2556
    %v2639 = vpack.c.b16 %v2559, %v2558
    %v2640 = vpack.c.b16 %v2561, %v2560
    %v2641 = vpack.c.b16 %v2563, %v2562
    %v2642 = vpack.c.b16 %v2565, %v2564
    %v2643 = vpack.c.b16 %v2567, %v2566
    %v2644 = vpack.c.b16 %v2569, %v2568
    %v2645 = vpack.c.b16 %v2571, %v2570
    %v2646 = vpack.c.b16 %v2573, %v2572
    %v2647 = vpack.c.b16 %v2575, %v2574
    %v2648 = vpack.c.b16 %v2577, %v2576
    %v2649 = vpack.c.b16 %v2579, %v2578
    %v2650 = vpack.c.b16 %v2581, %v2580
    %v2651 = vpack.c.b16 %v2583, %v2582
    %v2652 = vpack.c.b16 %v2585, %v2584
    %v2653 = vpack.c.b16 %v2587, %v2586
    %v2654 = vpack.c.b16 %v2589, %v2588
    %v2655 = vpack.c.b16 %v2591, %v2590
    %2720 = vmatpush.bf16.msra.mxu0 %v2599
    %2721 = vmatpush.bf16.msra.mxu0 %v2598
    %2722 = vmatpush.bf16.msra.mxu0 %v2597
    %2723 = vmatpush.bf16.msra.mxu0 %v2596
    %2724 = vmatpush.bf16.msra.mxu0 %v2595
    %2725 = vmatpush.bf16.msra.mxu0 %v2594
    %2726 = vmatpush.bf16.msra.mxu0 %v2593
    %2727 = vmatpush.bf16.msra.mxu0 %v2592
    %2728 = vmatmul.bf16.gmra.mxu0 %v2196
    %v2729 = vpop.f32.mrf.mxu0
    %v2730 = vadd.f32 %v2334, %v2729
    %v2731 = vpop.f32.mrf.mxu0
    %v2732 = vadd.f32 %v2334, %v2731
    %2733 = vdwg.mxu0
    %2734 = vmatpush.bf16.msra.mxu0 %v2607
    %2735 = vmatpush.bf16.msra.mxu0 %v2606
    %2736 = vmatpush.bf16.msra.mxu0 %v2605
    %2737 = vmatpush.bf16.msra.mxu0 %v2604
    %2738 = vmatpush.bf16.msra.mxu0 %v2603
    %2739 = vmatpush.bf16.msra.mxu0 %v2602
    %2740 = vmatpush.bf16.msra.mxu0 %v2601
    %2741 = vmatpush.bf16.msra.mxu0 %v2600
    %2742 = vmatmul.bf16.gmra.mxu0 %v2197
    %v2743 = vpop.f32.mrf.mxu0
    %v2744 = vadd.f32 %v2730, %v2743
    %v2745 = vpop.f32.mrf.mxu0
    %v2746 = vadd.f32 %v2732, %v2745
    %2747 = vdwg.mxu0
    %2748 = vmatpush.bf16.msra.mxu0 %v2615
    %2749 = vmatpush.bf16.msra.mxu0 %v2614
    %2750 = vmatpush.bf16.msra.mxu0 %v2613
    %2751 = vmatpush.bf16.msra.mxu0 %v2612
    %2752 = vmatpush.bf16.msra.mxu0 %v2611
    %2753 = vmatpush.bf16.msra.mxu0 %v2610
    %2754 = vmatpush.bf16.msra.mxu0 %v2609
    %2755 = vmatpush.bf16.msra.mxu0 %v2608
    %2756 = vmatmul.bf16.gmra.mxu0 %v2198
    %v2757 = vpop.f32.mrf.mxu0
    %v2758 = vadd.f32 %v2744, %v2757
    %v2759 = vpop.f32.mrf.mxu0
    %v2760 = vadd.f32 %v2746, %v2759
    %2761 = vdwg.mxu0
    %2762 = vmatpush.bf16.msra.mxu0 %v2623
    %2763 = vmatpush.bf16.msra.mxu0 %v2622
    %2764 = vmatpush.bf16.msra.mxu0 %v2621
    %2765 = vmatpush.bf16.msra.mxu0 %v2620
    %2766 = vmatpush.bf16.msra.mxu0 %v2619
    %2767 = vmatpush.bf16.msra.mxu0 %v2618
    %2768 = vmatpush.bf16.msra.mxu0 %v2617
    %2769 = vmatpush.bf16.msra.mxu0 %v2616
    %2770 = vmatmul.bf16.gmra.mxu0 %v2199
    %v2771 = vpop.f32.mrf.mxu0
    %v2772 = vadd.f32 %v2758, %v2771
    %v2773 = vpop.f32.mrf.mxu0
    %v2774 = vadd.f32 %v2760, %v2773
    %2775 = vdwg.mxu0
    %2776 = vmatpush.bf16.msra.mxu0 %v2631
    %2777 = vmatpush.bf16.msra.mxu0 %v2630
    %2778 = vmatpush.bf16.msra.mxu0 %v2629
    %2779 = vmatpush.bf16.msra.mxu0 %v2628
    %2780 = vmatpush.bf16.msra.mxu0 %v2627
    %2781 = vmatpush.bf16.msra.mxu0 %v2626
    %2782 = vmatpush.bf16.msra.mxu0 %v2625
    %2783 = vmatpush.bf16.msra.mxu0 %v2624
    %2784 = vmatmul.bf16.gmra.mxu0 %v2200
    %v2785 = vpop.f32.mrf.mxu0
    %v2786 = vadd.f32 %v2772, %v2785
    %v2787 = vpop.f32.mrf.mxu0
    %v2788 = vadd.f32 %v2774, %v2787
    %2789 = vdwg.mxu0
    %2790 = vmatpush.bf16.msra.mxu0 %v2639
    %2791 = vmatpush.bf16.msra.mxu0 %v2638
    %2792 = vmatpush.bf16.msra.mxu0 %v2637
    %2793 = vmatpush.bf16.msra.mxu0 %v2636
    %2794 = vmatpush.bf16.msra.mxu0 %v2635
    %2795 = vmatpush.bf16.msra.mxu0 %v2634
    %2796 = vmatpush.bf16.msra.mxu0 %v2633
    %2797 = vmatpush.bf16.msra.mxu0 %v2632
    %2798 = vmatmul.bf16.gmra.mxu0 %v2201
    %v2799 = vpop.f32.mrf.mxu0
    %v2800 = vadd.f32 %v2786, %v2799
    %v2801 = vpop.f32.mrf.mxu0
    %v2802 = vadd.f32 %v2788, %v2801
    %2803 = vdwg.mxu0
    %2804 = vmatpush.bf16.msra.mxu0 %v2647
    %2805 = vmatpush.bf16.msra.mxu0 %v2646
    %2806 = vmatpush.bf16.msra.mxu0 %v2645
    %2807 = vmatpush.bf16.msra.mxu0 %v2644
    %2808 = vmatpush.bf16.msra.mxu0 %v2643
    %2809 = vmatpush.bf16.msra.mxu0 %v2642
    %2810 = vmatpush.bf16.msra.mxu0 %v2641
    %2811 = vmatpush.bf16.msra.mxu0 %v2640
    %2812 = vmatmul.bf16.gmra.mxu0 %v2202
    %v2813 = vpop.f32.mrf.mxu0
    %v2814 = vadd.f32 %v2800, %v2813
    %v2815 = vpop.f32.mrf.mxu0
    %v2816 = vadd.f32 %v2802, %v2815
    %2817 = vdwg.mxu0
    %2818 = vmatpush.bf16.msra.mxu0 %v2655
    %2819 = vmatpush.bf16.msra.mxu0 %v2654
    %2820 = vmatpush.bf16.msra.mxu0 %v2653
    %2821 = vmatpush.bf16.msra.mxu0 %v2652
    %2822 = vmatpush.bf16.msra.mxu0 %v2651
    %2823 = vmatpush.bf16.msra.mxu0 %v2650
    %2824 = vmatpush.bf16.msra.mxu0 %v2649
    %2825 = vmatpush.bf16.msra.mxu0 %v2648
    %2826 = vmatmul.bf16.gmra.mxu0 %v2203
    %v2827 = vpop.f32.mrf.mxu0
    %v2828 = vadd.f32 %v2814, %v2827
    %v2829 = vpop.f32.mrf.mxu0
    %v2830 = vadd.f32 %v2816, %v2829
    %2831 = vdwg.mxu0
    %v2832 = vmul.f32 %v2828, %v2828
    %v2833 = vmul.f32 %v2830, %v2830
    %2834 = vadd.xlane.f32.xlu0 %v2832
    %v2835 = vpop.xlane.xlu0 %2834
    %2836 = vadd.xlane.f32.xlu0 %v2833
    %v2837 = vpop.xlane.xlu0 %2836
    %v2838 = vmax.f32 %v2835, 1e-24
    %v2839 = vmax.f32 %v2837, 1e-24
    %v2840 = vrsqrt.pop %v2838
    %v2841 = vmul.f32 %v2840, %v2838
    %v2842 = vmul.f32 %v2841, %v2840
    %v2843 = vmul.f32 0.5, %v2842
    %v2844 = vsub.f32 1.5, %v2843
    %v2845 = vmul.f32 %v2840, %v2844
    %vm2846 = vweird.f32 %v2838
    %vm2847 = vweird.f32 %v2840
    %vm2848 = vmor %vm2846, %vm2847
    %v2849 = vsel %vm2848, %v2840, %v2845
    %v2850 = vrsqrt.pop %v2839
    %v2851 = vmul.f32 %v2850, %v2839
    %v2852 = vmul.f32 %v2851, %v2850
    %v2853 = vmul.f32 0.5, %v2852
    %v2854 = vsub.f32 1.5, %v2853
    %v2855 = vmul.f32 %v2850, %v2854
    %vm2856 = vweird.f32 %v2839
    %vm2857 = vweird.f32 %v2850
    %vm2858 = vmor %vm2856, %vm2857
    %v2859 = vsel %vm2858, %v2850, %v2855
    %v2860 = vmul.f32 %v2828, %v2849
    %v2861 = vmul.f32 %v2830, %v2859
    %2862 = vst [vmem:[#allocation10] sm:$0xff] %v2860
    %2863 = vst [vmem:[#allocation10 + $0x8] sm:$0xff] %v2861
    // Predicated region
    $region38: #{tpu_custom_call.1} parent=1 // pred_check
      _
    $region39: #{tpu_custom_call.1} parent=1 // pred_check_branch
      %2865 = sbr.rel (0) target = $region41
    $region40: #{tpu_custom_call.1} parent=1 // pred_region
      %2867 = vsyncadd [#allocation4], 0
      %s2868 = sshll.u32 [#allocation10], 4
      %s2869 = int_to_ptr.vmem [resolvable:$true] %s2868
      %s2870 = sshll.u32 %s5, 4
      %s2871 = int_to_ptr.hbm [resolvable:$true] %s2870
      %2876 = dma.vmem_to_hbm [thread:$0]  %s2869, 256, %s2871, [#allocation4], 128, 128, 8
    $region41: #{tpu_custom_call.1} parent=1 // pred_fallthru
      _
    // Predicated region
    $region42: #{tpu_custom_call.1} parent=1 // pred_check
      _
    $region43: #{tpu_custom_call.1} parent=1 // pred_check_branch
      %2878 = sbr.rel (0) target = $region45
    $region44: #{tpu_custom_call.1} parent=1 // pred_region
      %2880 = dma.done [#allocation4], 256
    $region45: #{tpu_custom_call.1} parent=1 // pred_fallthru
      _
    %2881 = vsyncpa [#allocation3], 1
    %2882 = vsyncpa [#allocation6], 1
    %2883 = vsyncpa [#allocation9], 1
    %2884 = vsyncpa [#allocation4], 1

</llo_original>
